<compile_context>
chip_gen: v5e
topology: v5e:2x2
jax: 0.10.0
libtpu: 0.0.40
codegen_flags: <defaults>
</compile_context>

<pallas_src>
import functools

import jax
import jax.numpy as jnp
from jax.experimental import pallas as pl
from jax.experimental.pallas import tpu as pltpu


# ----------------------------- kernel -----------------------------

def _mmd_vae_kernel(x_ref,
                    ew1, eb1, ew2, eb2, ew3, eb3, ew4, eb4,
                    dw1, db1, dw2, db2, dw3, db3, dw4, db4,
                    z_ref, recon_ref, *, alpha, seq_len, aa_var):
    """Fused encoder + decoder forward for one (TILE_B, q) batch tile."""

    def linear(h_f32, w_ref, b_ref):
        w = w_ref[...]                                   # bf16, resident in VMEM
        return jnp.dot(h_f32.astype(w.dtype), w,
                       preferred_element_type=jnp.float32) + b_ref[...]

    def lrelu(h):
        return jnp.where(h > 0, h, alpha * h)

    x = x_ref[...].astype(jnp.float32)                   # (TILE_B, q)

    # ---------------- Encoder ----------------
    # Linear(q, h) -> LeakyReLU -> Dropout(identity, eval)
    h = lrelu(linear(x, ew1, eb1))
    # Linear(h, h) -> LeakyReLU -> BatchNorm1d  (BN folded into next linear)
    h = lrelu(linear(h, ew2, eb2))
    # Linear(h, h) -> LeakyReLU
    h = lrelu(linear(h, ew3, eb3))
    # Linear(h, zdim)
    z = linear(h, ew4, eb4)                              # (TILE_B, zdim) f32
    z_ref[...] = z

    # ---------------- Decoder ----------------
    # Linear(zdim, h) -> LeakyReLU -> BatchNorm1d (folded into next linear)
    h = lrelu(linear(z, dw1, db1))
    # Linear(h, h) -> LeakyReLU -> Dropout(identity, eval)
    h = lrelu(linear(h, dw2, db2))
    # Linear(h, h) -> LeakyReLU -> BatchNorm1d (folded into next linear)
    h = lrelu(linear(h, dw3, db3))
    # Linear(h, q)
    logits = linear(h, dw4, db4)                         # (TILE_B, q) f32

    # Grouped softmax over aa_var-sized groups; store stays lane-dense (TILE_B, q).
    tb = logits.shape[0]
    l3 = logits.reshape(tb, seq_len, aa_var)
    m = jnp.max(l3, axis=2, keepdims=True)
    e = jnp.exp(l3 - m)
    denom = jnp.sum(e, axis=2, keepdims=True)
    sm = e * pl.reciprocal(denom, approx=True)           # reciprocal on EUP slot
    recon_ref[...] = sm.reshape(tb, seq_len * aa_var)


# ----------------------- parameter construction -----------------------

def _round_up(n, m):
    return ((n + m - 1) // m) * m


def _init_linear(key, fan_in, fan_out):
    """PyTorch-style default Linear init; weight pre-transposed to (in, out)."""
    kw, kb = jax.random.split(key)
    bound = 1.0 / float(fan_in) ** 0.5
    w = jax.random.uniform(kw, (fan_in, fan_out), jnp.float32, -bound, bound)
    b = jax.random.uniform(kb, (1, fan_out), jnp.float32, -bound, bound)
    return w, b


def _bn_eval_scale_shift(num_features, eps=1e-5):
    """Eval-mode BatchNorm1d as per-feature affine (default gamma=1, beta=0,
    running_mean=0, running_var=1)."""
    gamma = jnp.ones((num_features,), jnp.float32)
    beta = jnp.zeros((num_features,), jnp.float32)
    r_mean = jnp.zeros((num_features,), jnp.float32)
    r_var = jnp.ones((num_features,), jnp.float32)
    scale = gamma / jnp.sqrt(r_var + eps)
    shift = beta - r_mean * scale
    return scale, shift


def _fold_bn_into_next(w, b, scale, shift):
    """(h*scale + shift) @ W + b  ==  h @ (scale[:,None]*W) + (shift @ W + b)."""
    w_f = scale[:, None] * w
    b_f = b + shift[None, :] @ w
    return w_f, b_f


def _pad_linear(w, b, in_pad, out_pad, weight_dtype):
    """Zero-pad (in, out) weight + (1, out) bias up to padded dims; cast weight."""
    in_dim, out_dim = w.shape
    w_p = jnp.zeros((in_pad, out_pad), jnp.float32).at[:in_dim, :out_dim].set(w)
    b_p = jnp.zeros((1, out_pad), jnp.float32).at[:, :out_dim].set(b)
    return w_p.astype(weight_dtype), b_p


def make_mmd_vae_params(key, seq_len, aa_var, zdim, weight_dtype=jnp.bfloat16):
    q = seq_len * aa_var
    hsize = int(1.5 * q)
    hp = _round_up(hsize, 128)        # lane-aligned hidden size (padding is exact)
    keys = jax.random.split(key, 8)

    # ---- Encoder linears ----
    ew1, eb1 = _init_linear(keys[0], q, hsize)
    ew2, eb2 = _init_linear(keys[1], hsize, hsize)
    ew3, eb3 = _init_linear(keys[2], hsize, hsize)
    ew4, eb4 = _init_linear(keys[3], hsize, zdim)
    # Encoder BN sits between LeakyReLU(layer2) and Linear3 -> fold into Linear3.
    e_s, e_t = _bn_eval_scale_shift(hsize)
    ew3, eb3 = _fold_bn_into_next(ew3, eb3, e_s, e_t)

    # ---- Decoder linears ----
    dw1, db1 = _init_linear(keys[4], zdim, hsize)
    dw2, db2 = _init_linear(keys[5], hsize, hsize)
    dw3, db3 = _init_linear(keys[6], hsize, hsize)
    dw4, db4 = _init_linear(keys[7], hsize, q)
    # Decoder BN1 precedes Linear2; BN2 precedes Linear4 -> fold.
    d1_s, d1_t = _bn_eval_scale_shift(hsize)
    d2_s, d2_t = _bn_eval_scale_shift(hsize)
    dw2, db2 = _fold_bn_into_next(dw2, db2, d1_s, d1_t)
    dw4, db4 = _fold_bn_into_next(dw4, db4, d2_s, d2_t)

    # ---- Pad hidden dim to a multiple of 128 and cast weights ----
    ew1, eb1 = _pad_linear(ew1, eb1, q, hp, weight_dtype)
    ew2, eb2 = _pad_linear(ew2, eb2, hp, hp, weight_dtype)
    ew3, eb3 = _pad_linear(ew3, eb3, hp, hp, weight_dtype)
    ew4, eb4 = _pad_linear(ew4, eb4, hp, zdim, weight_dtype)
    dw1, db1 = _pad_linear(dw1, db1, zdim, hp, weight_dtype)
    dw2, db2 = _pad_linear(dw2, db2, hp, hp, weight_dtype)
    dw3, db3 = _pad_linear(dw3, db3, hp, hp, weight_dtype)
    dw4, db4 = _pad_linear(dw4, db4, hp, q, weight_dtype)

    return (ew1, eb1, ew2, eb2, ew3, eb3, ew4, eb4,
            dw1, db1, dw2, db2, dw3, db3, dw4, db4)


# ----------------------------- wrapper -----------------------------

def _vmem_limit_bytes(params, tile_b, q, zdim):
    w_bytes = sum(int(p.size) * p.dtype.itemsize for p in params)
    act_bytes = tile_b * (q + zdim + q) * 4          # x + z + recon tiles (f32)
    est = 2 * w_bytes + 2 * act_bytes + (8 << 20)    # double-buffer + headroom
    # Cap below v7x's 64 MiB physical VMEM; floor at 32 MiB scoped budget.
    return int(min(max(est, 32 << 20), 56 << 20))


def mmd_vae_forward(x, params, *, seq_len, aa_var, zdim, alpha, tile_b=128):
    """x: (B, seq_len, aa_var) -> (z: (B, zdim), recon: (B, seq_len, aa_var))."""
    batch = x.shape[0]
    q = seq_len * aa_var
    x2d = x.reshape(batch, q).astype(jnp.float32)    # glue: x.view(B, q)

    # Batch tile: multiple of 8 sublanes; pad batch to a tile multiple.
    tile_b = _round_up(max(1, min(tile_b, batch)), 8)
    b_pad = _round_up(batch, tile_b)
    if b_pad != batch:
        x2d = jnp.pad(x2d, ((0, b_pad - batch), (0, 0)))
    n_tiles = b_pad // tile_b

    # Activations: tiled over batch. Weights/biases: one block, resident in VMEM.
    x_spec = pl.BlockSpec((tile_b, q), lambda i: (i, 0))
    w_specs = [pl.BlockSpec(p.shape, lambda i: (0, 0)) for p in params]
    z_spec = pl.BlockSpec((tile_b, zdim), lambda i: (i, 0))
    recon_spec = pl.BlockSpec((tile_b, q), lambda i: (i, 0))

    kernel = functools.partial(_mmd_vae_kernel,
                               alpha=alpha, seq_len=seq_len, aa_var=aa_var)

    z, recon2d = pl.pallas_call(
        kernel,
        out_shape=(
            jax.ShapeDtypeStruct((b_pad, zdim), jnp.float32),
            jax.ShapeDtypeStruct((b_pad, q), jnp.float32),
        ),
        grid=(n_tiles,),
        in_specs=[x_spec] + w_specs,
        out_specs=(z_spec, recon_spec),
        compiler_params=pltpu.CompilerParams(
            dimension_semantics=("parallel",),
            vmem_limit_bytes=_vmem_limit_bytes(params, tile_b, q, zdim)),
    )(x2d, *params)

    z = z[:batch]
    recon = recon2d[:batch].reshape(batch, seq_len, aa_var)
    return z, recon


# --------------------- pure-JAX reference (for checking) ---------------------

def _reference_forward(x, params, *, seq_len, aa_var, zdim, alpha):
    (ew1, eb1, ew2, eb2, ew3, eb3, ew4, eb4,
     dw1, db1, dw2, db2, dw3, db3, dw4, db4) = params
    b = x.shape[0]
    h = x.reshape(b, seq_len * aa_var).astype(jnp.float32)

    def lin(h, w, bb):
        return jnp.dot(h.astype(w.dtype), w,
                       preferred_element_type=jnp.float32) + bb

    def lrelu(h):
        return jnp.where(h > 0, h, alpha * h)

    h = lrelu(lin(h, ew1, eb1))
    h = lrelu(lin(h, ew2, eb2))
    h = lrelu(lin(h, ew3, eb3))
    z = lin(h, ew4, eb4)
    g = lrelu(lin(z, dw1, db1))
    g = lrelu(lin(g, dw2, db2))
    g = lrelu(lin(g, dw3, db3))
    logits = lin(g, dw4, db4)
    recon = jax.nn.softmax(logits.reshape(b, seq_len, aa_var), axis=2)
    return z, recon


# ------------------------------- main -------------------------------

if __name__ == "__main__":
    # Small shapes consistent with the module: q = seq_len * aa_var, hsize = 1.5*q.
    seq_len, aa_var, zdims, alpha = 8, 4, 8, 0.2
    batch = 12          # padded to 16; tile_b=8 -> 2 grid steps (exercises pipeline)

    key = jax.random.PRNGKey(0)
    k_x, k_p = jax.random.split(key)

    x = jax.random.uniform(k_x, (batch, seq_len, aa_var), jnp.float32)
    params = make_mmd_vae_params(k_p, seq_len, aa_var, zdims)

    fwd = jax.jit(functools.partial(mmd_vae_forward,
                                    seq_len=seq_len, aa_var=aa_var,
                                    zdim=zdims, alpha=alpha, tile_b=8))
    z, recon_x = fwd(x, params)
    jax.block_until_ready((z, recon_x))

    assert z.shape == (batch, zdims)
    assert recon_x.shape == (batch, seq_len, aa_var)
    assert bool(jnp.all(jnp.isfinite(z))) and bool(jnp.all(jnp.isfinite(recon_x)))
    # Softmax rows sum to 1 (approx reciprocal -> loose tolerance).
    assert bool(jnp.allclose(jnp.sum(recon_x, axis=2), 1.0, atol=1e-2))

    # Cross-check against a pure-JAX reference using the same folded/padded params.
    z_ref, recon_ref = _reference_forward(x, params, seq_len=seq_len,
                                          aa_var=aa_var, zdim=zdims, alpha=alpha)
    assert bool(jnp.allclose(z, z_ref, atol=2e-2, rtol=2e-2))
    assert bool(jnp.allclose(recon_x, recon_ref, atol=2e-2, rtol=2e-2))

    print("KERNEL_OK")
</pallas_src>

<mosaic_0001>
module attributes {stable_mosaic.version = 11 : i64} {
  func.func @_mmd_vae_kernel(%arg0: i32, %arg1: memref<8x32xf32, #tpu.memory_space<vmem>>, %arg2: memref<32x128xbf16, #tpu.memory_space<vmem>>, %arg3: memref<1x128xf32, #tpu.memory_space<vmem>>, %arg4: memref<128x128xbf16, #tpu.memory_space<vmem>>, %arg5: memref<1x128xf32, #tpu.memory_space<vmem>>, %arg6: memref<128x128xbf16, #tpu.memory_space<vmem>>, %arg7: memref<1x128xf32, #tpu.memory_space<vmem>>, %arg8: memref<128x8xbf16, #tpu.memory_space<vmem>>, %arg9: memref<1x8xf32, #tpu.memory_space<vmem>>, %arg10: memref<8x128xbf16, #tpu.memory_space<vmem>>, %arg11: memref<1x128xf32, #tpu.memory_space<vmem>>, %arg12: memref<128x128xbf16, #tpu.memory_space<vmem>>, %arg13: memref<1x128xf32, #tpu.memory_space<vmem>>, %arg14: memref<128x128xbf16, #tpu.memory_space<vmem>>, %arg15: memref<1x128xf32, #tpu.memory_space<vmem>>, %arg16: memref<128x32xbf16, #tpu.memory_space<vmem>>, %arg17: memref<1x32xf32, #tpu.memory_space<vmem>>, %arg18: memref<8x8xf32, #tpu.memory_space<vmem>>, %arg19: memref<8x32xf32, #tpu.memory_space<vmem>>) attributes {dimension_semantics = [#tpu.dimension_semantics<parallel>], iteration_bounds = array<i64: 2>, scalar_prefetch = 0 : i64, scratch_operands = 0 : i64, tpu.core_type = #tpu.core_type<tc>, window_params = [{transform_indices = @transform_0, window_bounds = array<i64: 8, 32>}, {pipeline_mode = #tpu.pipeline_mode<synchronous>, transform_indices = @transform_1, window_bounds = array<i64: 32, 128>}, {pipeline_mode = #tpu.pipeline_mode<synchronous>, transform_indices = @transform_2, window_bounds = array<i64: 1, 128>}, {pipeline_mode = #tpu.pipeline_mode<synchronous>, transform_indices = @transform_3, window_bounds = array<i64: 128, 128>}, {pipeline_mode = #tpu.pipeline_mode<synchronous>, transform_indices = @transform_4, window_bounds = array<i64: 1, 128>}, {pipeline_mode = #tpu.pipeline_mode<synchronous>, transform_indices = @transform_5, window_bounds = array<i64: 128, 128>}, {pipeline_mode = #tpu.pipeline_mode<synchronous>, transform_indices = @transform_6, window_bounds = array<i64: 1, 128>}, {pipeline_mode = #tpu.pipeline_mode<synchronous>, transform_indices = @transform_7, window_bounds = array<i64: 128, 8>}, {pipeline_mode = #tpu.pipeline_mode<synchronous>, transform_indices = @transform_8, window_bounds = array<i64: 1, 8>}, {pipeline_mode = #tpu.pipeline_mode<synchronous>, transform_indices = @transform_9, window_bounds = array<i64: 8, 128>}, {pipeline_mode = #tpu.pipeline_mode<synchronous>, transform_indices = @transform_10, window_bounds = array<i64: 1, 128>}, {pipeline_mode = #tpu.pipeline_mode<synchronous>, transform_indices = @transform_11, window_bounds = array<i64: 128, 128>}, {pipeline_mode = #tpu.pipeline_mode<synchronous>, transform_indices = @transform_12, window_bounds = array<i64: 1, 128>}, {pipeline_mode = #tpu.pipeline_mode<synchronous>, transform_indices = @transform_13, window_bounds = array<i64: 128, 128>}, {pipeline_mode = #tpu.pipeline_mode<synchronous>, transform_indices = @transform_14, window_bounds = array<i64: 1, 128>}, {pipeline_mode = #tpu.pipeline_mode<synchronous>, transform_indices = @transform_15, window_bounds = array<i64: 128, 32>}, {pipeline_mode = #tpu.pipeline_mode<synchronous>, transform_indices = @transform_16, window_bounds = array<i64: 1, 32>}, {transform_indices = @transform_17, window_bounds = array<i64: 8, 8>}, {transform_indices = @transform_18, window_bounds = array<i64: 8, 32>}]} {
    %c0 = arith.constant 0 : index
    %c0_0 = arith.constant 0 : index
    %0 = vector.load %arg1[%c0, %c0_0] : memref<8x32xf32, #tpu.memory_space<vmem>>, vector<8x32xf32>
    %c0_1 = arith.constant 0 : index
    %c0_2 = arith.constant 0 : index
    %1 = vector.load %arg2[%c0_1, %c0_2] : memref<32x128xbf16, #tpu.memory_space<vmem>>, vector<32x128xbf16>
    %2 = arith.truncf %0 : vector<8x32xf32> to vector<8x32xbf16>
    %cst = arith.constant dense<0.000000e+00> : vector<8x128xf32>
    %3 = tpu.matmul %2, %1, %cst {dimension_numbers = #tpu.dot_dimension_numbers<[1], [0], [0], [1], [0, 0, 1, 1], [], []>} : vector<8x32xbf16>, vector<32x128xbf16>, vector<8x128xf32> -> vector<8x128xf32>
    %c0_3 = arith.constant 0 : index
    %c0_4 = arith.constant 0 : index
    %4 = vector.load %arg3[%c0_3, %c0_4] : memref<1x128xf32, #tpu.memory_space<vmem>>, vector<1x128xf32>
    %5 = vector.broadcast %4 : vector<1x128xf32> to vector<8x128xf32>
    %6 = arith.addf %3, %5 : vector<8x128xf32>
    %cst_5 = arith.constant 0.000000e+00 : f32
    %7 = vector.broadcast %cst_5 : f32 to vector<8x128xf32>
    %8 = arith.cmpf ogt, %6, %7 : vector<8x128xf32>
    %cst_6 = arith.constant 2.000000e-01 : f32
    %9 = vector.broadcast %cst_6 : f32 to vector<8x128xf32>
    %10 = arith.mulf %9, %6 : vector<8x128xf32>
    %11 = arith.select %8, %6, %10 : vector<8x128xi1>, vector<8x128xf32>
    %c0_7 = arith.constant 0 : index
    %c0_8 = arith.constant 0 : index
    %12 = vector.load %arg4[%c0_7, %c0_8] : memref<128x128xbf16, #tpu.memory_space<vmem>>, vector<128x128xbf16>
    %13 = arith.truncf %11 : vector<8x128xf32> to vector<8x128xbf16>
    %cst_9 = arith.constant dense<0.000000e+00> : vector<8x128xf32>
    %14 = tpu.matmul %13, %12, %cst_9 {dimension_numbers = #tpu.dot_dimension_numbers<[1], [0], [0], [1], [0, 0, 1, 1], [], []>} : vector<8x128xbf16>, vector<128x128xbf16>, vector<8x128xf32> -> vector<8x128xf32>
    %c0_10 = arith.constant 0 : index
    %c0_11 = arith.constant 0 : index
    %15 = vector.load %arg5[%c0_10, %c0_11] : memref<1x128xf32, #tpu.memory_space<vmem>>, vector<1x128xf32>
    %16 = vector.broadcast %15 : vector<1x128xf32> to vector<8x128xf32>
    %17 = arith.addf %14, %16 : vector<8x128xf32>
    %cst_12 = arith.constant 0.000000e+00 : f32
    %18 = vector.broadcast %cst_12 : f32 to vector<8x128xf32>
    %19 = arith.cmpf ogt, %17, %18 : vector<8x128xf32>
    %cst_13 = arith.constant 2.000000e-01 : f32
    %20 = vector.broadcast %cst_13 : f32 to vector<8x128xf32>
    %21 = arith.mulf %20, %17 : vector<8x128xf32>
    %22 = arith.select %19, %17, %21 : vector<8x128xi1>, vector<8x128xf32>
    %c0_14 = arith.constant 0 : index
    %c0_15 = arith.constant 0 : index
    %23 = vector.load %arg6[%c0_14, %c0_15] : memref<128x128xbf16, #tpu.memory_space<vmem>>, vector<128x128xbf16>
    %24 = arith.truncf %22 : vector<8x128xf32> to vector<8x128xbf16>
    %cst_16 = arith.constant dense<0.000000e+00> : vector<8x128xf32>
    %25 = tpu.matmul %24, %23, %cst_16 {dimension_numbers = #tpu.dot_dimension_numbers<[1], [0], [0], [1], [0, 0, 1, 1], [], []>} : vector<8x128xbf16>, vector<128x128xbf16>, vector<8x128xf32> -> vector<8x128xf32>
    %c0_17 = arith.constant 0 : index
    %c0_18 = arith.constant 0 : index
    %26 = vector.load %arg7[%c0_17, %c0_18] : memref<1x128xf32, #tpu.memory_space<vmem>>, vector<1x128xf32>
    %27 = vector.broadcast %26 : vector<1x128xf32> to vector<8x128xf32>
    %28 = arith.addf %25, %27 : vector<8x128xf32>
    %cst_19 = arith.constant 0.000000e+00 : f32
    %29 = vector.broadcast %cst_19 : f32 to vector<8x128xf32>
    %30 = arith.cmpf ogt, %28, %29 : vector<8x128xf32>
    %cst_20 = arith.constant 2.000000e-01 : f32
    %31 = vector.broadcast %cst_20 : f32 to vector<8x128xf32>
    %32 = arith.mulf %31, %28 : vector<8x128xf32>
    %33 = arith.select %30, %28, %32 : vector<8x128xi1>, vector<8x128xf32>
    %c0_21 = arith.constant 0 : index
    %c0_22 = arith.constant 0 : index
    %34 = vector.load %arg8[%c0_21, %c0_22] : memref<128x8xbf16, #tpu.memory_space<vmem>>, vector<128x8xbf16>
    %35 = arith.truncf %33 : vector<8x128xf32> to vector<8x128xbf16>
    %cst_23 = arith.constant dense<0.000000e+00> : vector<8x8xf32>
    %36 = tpu.matmul %35, %34, %cst_23 {dimension_numbers = #tpu.dot_dimension_numbers<[1], [0], [0], [1], [0, 0, 1, 1], [], []>} : vector<8x128xbf16>, vector<128x8xbf16>, vector<8x8xf32> -> vector<8x8xf32>
    %c0_24 = arith.constant 0 : index
    %c0_25 = arith.constant 0 : index
    %37 = vector.load %arg9[%c0_24, %c0_25] : memref<1x8xf32, #tpu.memory_space<vmem>>, vector<1x8xf32>
    %38 = vector.broadcast %37 : vector<1x8xf32> to vector<8x8xf32>
    %39 = arith.addf %36, %38 : vector<8x8xf32>
    %c0_26 = arith.constant 0 : index
    %c0_27 = arith.constant 0 : index
    %40 = vector.load %arg18[%c0_26, %c0_27] : memref<8x8xf32, #tpu.memory_space<vmem>>, vector<8x8xf32>
    tpu.vector_store %arg18[%c0_26, %c0_27], %39 {strides = array<i32>} : memref<8x8xf32, #tpu.memory_space<vmem>>, vector<8x8xf32>,
    %c0_28 = arith.constant 0 : index
    %c0_29 = arith.constant 0 : index
    %41 = vector.load %arg10[%c0_28, %c0_29] : memref<8x128xbf16, #tpu.memory_space<vmem>>, vector<8x128xbf16>
    %42 = arith.truncf %39 : vector<8x8xf32> to vector<8x8xbf16>
    %cst_30 = arith.constant dense<0.000000e+00> : vector<8x128xf32>
    %43 = tpu.matmul %42, %41, %cst_30 {dimension_numbers = #tpu.dot_dimension_numbers<[1], [0], [0], [1], [0, 0, 1, 1], [], []>} : vector<8x8xbf16>, vector<8x128xbf16>, vector<8x128xf32> -> vector<8x128xf32>
    %c0_31 = arith.constant 0 : index
    %c0_32 = arith.constant 0 : index
    %44 = vector.load %arg11[%c0_31, %c0_32] : memref<1x128xf32, #tpu.memory_space<vmem>>, vector<1x128xf32>
    %45 = vector.broadcast %44 : vector<1x128xf32> to vector<8x128xf32>
    %46 = arith.addf %43, %45 : vector<8x128xf32>
    %cst_33 = arith.constant 0.000000e+00 : f32
    %47 = vector.broadcast %cst_33 : f32 to vector<8x128xf32>
    %48 = arith.cmpf ogt, %46, %47 : vector<8x128xf32>
    %cst_34 = arith.constant 2.000000e-01 : f32
    %49 = vector.broadcast %cst_34 : f32 to vector<8x128xf32>
    %50 = arith.mulf %49, %46 : vector<8x128xf32>
    %51 = arith.select %48, %46, %50 : vector<8x128xi1>, vector<8x128xf32>
    %c0_35 = arith.constant 0 : index
    %c0_36 = arith.constant 0 : index
    %52 = vector.load %arg12[%c0_35, %c0_36] : memref<128x128xbf16, #tpu.memory_space<vmem>>, vector<128x128xbf16>
    %53 = arith.truncf %51 : vector<8x128xf32> to vector<8x128xbf16>
    %cst_37 = arith.constant dense<0.000000e+00> : vector<8x128xf32>
    %54 = tpu.matmul %53, %52, %cst_37 {dimension_numbers = #tpu.dot_dimension_numbers<[1], [0], [0], [1], [0, 0, 1, 1], [], []>} : vector<8x128xbf16>, vector<128x128xbf16>, vector<8x128xf32> -> vector<8x128xf32>
    %c0_38 = arith.constant 0 : index
    %c0_39 = arith.constant 0 : index
    %55 = vector.load %arg13[%c0_38, %c0_39] : memref<1x128xf32, #tpu.memory_space<vmem>>, vector<1x128xf32>
    %56 = vector.broadcast %55 : vector<1x128xf32> to vector<8x128xf32>
    %57 = arith.addf %54, %56 : vector<8x128xf32>
    %cst_40 = arith.constant 0.000000e+00 : f32
    %58 = vector.broadcast %cst_40 : f32 to vector<8x128xf32>
    %59 = arith.cmpf ogt, %57, %58 : vector<8x128xf32>
    %cst_41 = arith.constant 2.000000e-01 : f32
    %60 = vector.broadcast %cst_41 : f32 to vector<8x128xf32>
    %61 = arith.mulf %60, %57 : vector<8x128xf32>
    %62 = arith.select %59, %57, %61 : vector<8x128xi1>, vector<8x128xf32>
    %c0_42 = arith.constant 0 : index
    %c0_43 = arith.constant 0 : index
    %63 = vector.load %arg14[%c0_42, %c0_43] : memref<128x128xbf16, #tpu.memory_space<vmem>>, vector<128x128xbf16>
    %64 = arith.truncf %62 : vector<8x128xf32> to vector<8x128xbf16>
    %cst_44 = arith.constant dense<0.000000e+00> : vector<8x128xf32>
    %65 = tpu.matmul %64, %63, %cst_44 {dimension_numbers = #tpu.dot_dimension_numbers<[1], [0], [0], [1], [0, 0, 1, 1], [], []>} : vector<8x128xbf16>, vector<128x128xbf16>, vector<8x128xf32> -> vector<8x128xf32>
    %c0_45 = arith.constant 0 : index
    %c0_46 = arith.constant 0 : index
    %66 = vector.load %arg15[%c0_45, %c0_46] : memref<1x128xf32, #tpu.memory_space<vmem>>, vector<1x128xf32>
    %67 = vector.broadcast %66 : vector<1x128xf32> to vector<8x128xf32>
    %68 = arith.addf %65, %67 : vector<8x128xf32>
    %cst_47 = arith.constant 0.000000e+00 : f32
    %69 = vector.broadcast %cst_47 : f32 to vector<8x128xf32>
    %70 = arith.cmpf ogt, %68, %69 : vector<8x128xf32>
    %cst_48 = arith.constant 2.000000e-01 : f32
    %71 = vector.broadcast %cst_48 : f32 to vector<8x128xf32>
    %72 = arith.mulf %71, %68 : vector<8x128xf32>
    %73 = arith.select %70, %68, %72 : vector<8x128xi1>, vector<8x128xf32>
    %c0_49 = arith.constant 0 : index
    %c0_50 = arith.constant 0 : index
    %74 = vector.load %arg16[%c0_49, %c0_50] : memref<128x32xbf16, #tpu.memory_space<vmem>>, vector<128x32xbf16>
    %75 = arith.truncf %73 : vector<8x128xf32> to vector<8x128xbf16>
    %cst_51 = arith.constant dense<0.000000e+00> : vector<8x32xf32>
    %76 = tpu.matmul %75, %74, %cst_51 {dimension_numbers = #tpu.dot_dimension_numbers<[1], [0], [0], [1], [0, 0, 1, 1], [], []>} : vector<8x128xbf16>, vector<128x32xbf16>, vector<8x32xf32> -> vector<8x32xf32>
    %c0_52 = arith.constant 0 : index
    %c0_53 = arith.constant 0 : index
    %77 = vector.load %arg17[%c0_52, %c0_53] : memref<1x32xf32, #tpu.memory_space<vmem>>, vector<1x32xf32>
    %78 = vector.broadcast %77 : vector<1x32xf32> to vector<8x32xf32>
    %79 = arith.addf %76, %78 : vector<8x32xf32>
    %80 = vector.shape_cast %79 : vector<8x32xf32> to vector<8x8x4xf32>
    %cst_54 = arith.constant dense<0xFF800000> : vector<8x8xf32>
    %81 = vector.multi_reduction <maximumf>, %80, %cst_54 [2] : vector<8x8x4xf32> to vector<8x8xf32>
    %82 = vector.shape_cast %81 : vector<8x8xf32> to vector<8x8x1xf32>
    %83 = vector.broadcast %82 : vector<8x8x1xf32> to vector<8x8x4xf32>
    %84 = arith.subf %80, %83 : vector<8x8x4xf32>
    %85 = math.exp %84 : vector<8x8x4xf32>
    %cst_55 = arith.constant dense<0.000000e+00> : vector<8x8xf32>
    %86 = vector.multi_reduction <add>, %85, %cst_55 [2] : vector<8x8x4xf32> to vector<8x8xf32>
    %87 = vector.shape_cast %86 : vector<8x8xf32> to vector<8x8x1xf32>
    %88 = tpu.reciprocal %87 {approx = true} : vector<8x8x1xf32> -> vector<8x8x1xf32>
    %89 = vector.broadcast %88 : vector<8x8x1xf32> to vector<8x8x4xf32>
    %90 = arith.mulf %85, %89 : vector<8x8x4xf32>
    %91 = vector.shape_cast %90 : vector<8x8x4xf32> to vector<8x32xf32>
    %c0_56 = arith.constant 0 : index
    %c0_57 = arith.constant 0 : index
    %92 = vector.load %arg19[%c0_56, %c0_57] : memref<8x32xf32, #tpu.memory_space<vmem>>, vector<8x32xf32>
    tpu.vector_store %arg19[%c0_56, %c0_57], %91 {strides = array<i32>} : memref<8x32xf32, #tpu.memory_space<vmem>>, vector<8x32xf32>,
    return
  }
  func.func @transform_0(%arg0: i32) -> (i32, i32) {
    %c0_i32 = arith.constant 0 : i32
    %c0_i32_0 = arith.constant 0 : i32
    return %arg0, %c0_i32 : i32, i32
  }
  func.func @transform_1(%arg0: i32) -> (i32, i32) {
    %c0_i32 = arith.constant 0 : i32
    %c0_i32_0 = arith.constant 0 : i32
    %c0_i32_1 = arith.constant 0 : i32
    return %c0_i32, %c0_i32_0 : i32, i32
  }
  func.func @transform_2(%arg0: i32) -> (i32, i32) {
    %c0_i32 = arith.constant 0 : i32
    %c0_i32_0 = arith.constant 0 : i32
    %c0_i32_1 = arith.constant 0 : i32
    return %c0_i32, %c0_i32_0 : i32, i32
  }
  func.func @transform_3(%arg0: i32) -> (i32, i32) {
    %c0_i32 = arith.constant 0 : i32
    %c0_i32_0 = arith.constant 0 : i32
    %c0_i32_1 = arith.constant 0 : i32
    return %c0_i32, %c0_i32_0 : i32, i32
  }
  func.func @transform_4(%arg0: i32) -> (i32, i32) {
    %c0_i32 = arith.constant 0 : i32
    %c0_i32_0 = arith.constant 0 : i32
    %c0_i32_1 = arith.constant 0 : i32
    return %c0_i32, %c0_i32_0 : i32, i32
  }
  func.func @transform_5(%arg0: i32) -> (i32, i32) {
    %c0_i32 = arith.constant 0 : i32
    %c0_i32_0 = arith.constant 0 : i32
    %c0_i32_1 = arith.constant 0 : i32
    return %c0_i32, %c0_i32_0 : i32, i32
  }
  func.func @transform_6(%arg0: i32) -> (i32, i32) {
    %c0_i32 = arith.constant 0 : i32
    %c0_i32_0 = arith.constant 0 : i32
    %c0_i32_1 = arith.constant 0 : i32
    return %c0_i32, %c0_i32_0 : i32, i32
  }
  func.func @transform_7(%arg0: i32) -> (i32, i32) {
    %c0_i32 = arith.constant 0 : i32
    %c0_i32_0 = arith.constant 0 : i32
    %c0_i32_1 = arith.constant 0 : i32
    return %c0_i32, %c0_i32_0 : i32, i32
  }
  func.func @transform_8(%arg0: i32) -> (i32, i32) {
    %c0_i32 = arith.constant 0 : i32
    %c0_i32_0 = arith.constant 0 : i32
    %c0_i32_1 = arith.constant 0 : i32
    return %c0_i32, %c0_i32_0 : i32, i32
  }
  func.func @transform_9(%arg0: i32) -> (i32, i32) {
    %c0_i32 = arith.constant 0 : i32
    %c0_i32_0 = arith.constant 0 : i32
    %c0_i32_1 = arith.constant 0 : i32
    return %c0_i32, %c0_i32_0 : i32, i32
  }
  func.func @transform_10(%arg0: i32) -> (i32, i32) {
    %c0_i32 = arith.constant 0 : i32
    %c0_i32_0 = arith.constant 0 : i32
    %c0_i32_1 = arith.constant 0 : i32
    return %c0_i32, %c0_i32_0 : i32, i32
  }
  func.func @transform_11(%arg0: i32) -> (i32, i32) {
    %c0_i32 = arith.constant 0 : i32
    %c0_i32_0 = arith.constant 0 : i32
    %c0_i32_1 = arith.constant 0 : i32
    return %c0_i32, %c0_i32_0 : i32, i32
  }
  func.func @transform_12(%arg0: i32) -> (i32, i32) {
    %c0_i32 = arith.constant 0 : i32
    %c0_i32_0 = arith.constant 0 : i32
    %c0_i32_1 = arith.constant 0 : i32
    return %c0_i32, %c0_i32_0 : i32, i32
  }
  func.func @transform_13(%arg0: i32) -> (i32, i32) {
    %c0_i32 = arith.constant 0 : i32
    %c0_i32_0 = arith.constant 0 : i32
    %c0_i32_1 = arith.constant 0 : i32
    return %c0_i32, %c0_i32_0 : i32, i32
  }
  func.func @transform_14(%arg0: i32) -> (i32, i32) {
    %c0_i32 = arith.constant 0 : i32
    %c0_i32_0 = arith.constant 0 : i32
    %c0_i32_1 = arith.constant 0 : i32
    return %c0_i32, %c0_i32_0 : i32, i32
  }
  func.func @transform_15(%arg0: i32) -> (i32, i32) {
    %c0_i32 = arith.constant 0 : i32
    %c0_i32_0 = arith.constant 0 : i32
    %c0_i32_1 = arith.constant 0 : i32
    return %c0_i32, %c0_i32_0 : i32, i32
  }
  func.func @transform_16(%arg0: i32) -> (i32, i32) {
    %c0_i32 = arith.constant 0 : i32
    %c0_i32_0 = arith.constant 0 : i32
    %c0_i32_1 = arith.constant 0 : i32
    return %c0_i32, %c0_i32_0 : i32, i32
  }
  func.func @transform_17(%arg0: i32) -> (i32, i32) {
    %c0_i32 = arith.constant 0 : i32
    %c0_i32_0 = arith.constant 0 : i32
    return %arg0, %c0_i32 : i32, i32
  }
  func.func @transform_18(%arg0: i32) -> (i32, i32) {
    %c0_i32 = arith.constant 0 : i32
    %c0_i32_0 = arith.constant 0 : i32
    return %arg0, %c0_i32 : i32, i32
  }
}

</mosaic_0001>

<llo_original>
// kernel: mmd_vae_forward.1
$region0: #{mmd_vae_forward.1}
  #allocation0 [shape = 'u32[]', space=smem, size = 0x4, offset = 0x4, fixed_abs, tag = 'smem constant byte address 0x4 - core index']
  #allocation1 [shape = 'u32[72,128]{1,0:T(1,128)}', space=vmem, size = 0x9000, scoped, tag = 'internal scratch']
  %s0 = inlined_call_operand.vmem [shape: f32[16,32], index: 0, kind: input, shape index: {}]
  %s1 = inlined_call_operand.vmem [shape: bf16[32,128], index: 1, kind: input, shape index: {}]
  %s2 = inlined_call_operand.vmem [shape: f32[1,128], index: 2, kind: input, shape index: {}]
  %s3 = inlined_call_operand.vmem [shape: bf16[128,128], index: 3, kind: input, shape index: {}]
  %s4 = inlined_call_operand.vmem [shape: f32[1,128], index: 4, kind: input, shape index: {}]
  %s5 = inlined_call_operand.vmem [shape: bf16[128,128], index: 5, kind: input, shape index: {}]
  %s6 = inlined_call_operand.hbm [shape: f32[1,128], index: 6, kind: input, shape index: {}]
  %s7 = inlined_call_operand.vmem [shape: bf16[128,8], index: 7, kind: input, shape index: {}]
  %s8 = inlined_call_operand.vmem [shape: f32[1,8], index: 8, kind: input, shape index: {}]
  %s9 = inlined_call_operand.vmem [shape: bf16[8,128], index: 9, kind: input, shape index: {}]
  %s10 = inlined_call_operand.vmem [shape: f32[1,128], index: 10, kind: input, shape index: {}]
  %s11 = inlined_call_operand.vmem [shape: bf16[128,128], index: 11, kind: input, shape index: {}]
  %s12 = inlined_call_operand.vmem [shape: f32[1,128], index: 12, kind: input, shape index: {}]
  %s13 = inlined_call_operand.hbm [shape: bf16[128,128], index: 13, kind: input, shape index: {}]
  %s14 = inlined_call_operand.vmem [shape: f32[1,128], index: 14, kind: input, shape index: {}]
  %s15 = inlined_call_operand.vmem [shape: bf16[128,32], index: 15, kind: input, shape index: {}]
  %s16 = inlined_call_operand.vmem [shape: f32[1,32], index: 16, kind: input, shape index: {}]
  %s17 = inlined_call_operand.vmem [shape: f32[16,8], index: 17, kind: output, shape index: {0}]
  %s18 = inlined_call_operand.vmem [shape: f32[16,32], index: 18, kind: output, shape index: {1}]
  %19 = xla_tuple %s17, %s18
  %s20 = sld [smem:[#allocation0]]
  $region117: #{mmd_vae_forward.1} parent=0
    _
  %s22 = ssub.s32 1, %s20
  %s23 = scalar_select 0, %s22, %s20
  $region1: #{mmd_vae_forward.1} parent=0
    #allocation2 [shape = 'u8[512]{0}', space=vmem, size = 0x400, scoped, tag = 'input window, operand 6, single buffered']
    #allocation3 [shape = 's32[2]{0}', space=sflag, size = 0x8, scoped, tag = 'scoped memory for mmd_vae_forward.1']
    #allocation4 [shape = 'u8[32768]{0}', space=vmem, size = 0x8000, scoped, tag = 'input window, operand 13, single buffered']
    #allocation5 [shape = 's32[1]{0}', space=sflag, size = 0x4, scoped, tag = 'scoped memory for mmd_vae_forward.1']
    %24 = vsyncpa [#allocation3], 0
    %25 = vsyncpa [#allocation5], 0
    loop: start=0, step=1, limit=4
    $region2: #{mmd_vae_forward.1} parent=1 // loop_pre_header
      _
    $region3: #{mmd_vae_forward.1} parent=1 // loop_header
      %s27 = sphi 0, %s31
      %p28 = scmp.ge.s32.totalorder %s27, 4
      %s37 = sphi 0, %s39
      %s40 = sphi 0, %s37
      %s41 = sphi 0, %s40
      %s57 = sphi 0, %s41
      %s61 = sphi 0, %s61
      %s63 = sphi 0, %s61
      %s64 = sphi 0, %s63
      %s78 = sphi 0, %s64
      %s82 = sphi 0, %s82
      %s84 = sphi 0, %s82
      %s85 = sphi 0, %s84
      %s99 = sphi 0, %s85
      %s103 = sphi 0, %s103
      %s105 = sphi 0, %s103
      %s106 = sphi 0, %s105
      %s120 = sphi 0, %s106
      %s124 = sphi 0, %s124
      %s126 = sphi 0, %s124
      %s127 = sphi 0, %s126
      %s141 = sphi 0, %s127
      %s145 = sphi 0, %s145
      %s147 = sphi 0, %s145
      %s148 = sphi 0, %s147
      %s162 = sphi 0, %s148
      %s166 = sphi 0, %s166
      %s168 = sphi 0, %s166
      %s169 = sphi 0, %s168
      %s183 = sphi 0, %s169
      %s187 = sphi 0, %s187
      %s189 = sphi 0, %s187
      %s190 = sphi 0, %s189
      %s204 = sphi 0, %s190
      %s208 = sphi 0, %s208
      %s210 = sphi 0, %s208
      %s211 = sphi 0, %s210
      %s225 = sphi 0, %s211
      %s229 = sphi 0, %s229
      %s231 = sphi 0, %s229
      %s232 = sphi 0, %s231
      %s246 = sphi 0, %s232
      %s250 = sphi 0, %s250
      %s252 = sphi 0, %s250
      %s253 = sphi 0, %s252
      %s267 = sphi 0, %s253
      %s271 = sphi 0, %s271
      %s273 = sphi 0, %s271
      %s274 = sphi 0, %s273
      %s288 = sphi 0, %s274
      %s292 = sphi 0, %s292
      %s294 = sphi 0, %s292
      %s295 = sphi 0, %s294
      %s309 = sphi 0, %s295
      %s313 = sphi 0, %s313
      %s315 = sphi 0, %s313
      %s316 = sphi 0, %s315
      %s330 = sphi 0, %s316
      %s334 = sphi 0, %s334
      %s336 = sphi 0, %s334
      %s337 = sphi 0, %s336
      %s351 = sphi 0, %s337
      %s355 = sphi 0, %s355
      %s357 = sphi 0, %s355
      %s358 = sphi 0, %s357
      %s372 = sphi 0, %s358
      %s376 = sphi 0, %s376
      %s378 = sphi 0, %s376
      %s379 = sphi 0, %s378
      %s393 = sphi 0, %s379
      %s399 = sphi 0, %s401
      %s402 = sphi 0, %s399
      %s403 = sphi 0, %s402
      %s419 = sphi 0, %s403
      %s425 = sphi 0, %s427
      %s428 = sphi 0, %s425
      %s429 = sphi 0, %s428
      %s445 = sphi 0, %s429
    $region4: #{mmd_vae_forward.1} parent=1 // loop_header_branch
      %30 = sbr.rel (%p28) target = $region8
    $region5: #{mmd_vae_forward.1} parent=1 // loop_body
      %s32 = ssub.s32 %s27, 1
      %s33 = ssub.s32 %s27, 2
      %s34 = sadd.s32 %s27, 1
      %s35 = ssub.s32 %s27, %s34
      %p36 = scmp.eq.s32.totalorder %s35, 0
      %s38 = sadd.s32 %s37, 1
      %s39 = scalar_select %p36, %s37, %s38
      %p42 = pneg %p36
      %p43 = scmp.eq.s32.totalorder %s27, 1
      %p44 = por %p42, %p43
      %p45 = scmp.ne.s32.totalorder %s37, %s40
      %p46 = scmp.eq.s32.totalorder %s27, 0
      %p47 = por %p45, %p46
      %p48 = scmp.ne.s32.totalorder %s37, %s40
      %p49 = scmp.eq.s32.totalorder %s32, 1
      %p50 = por %p48, %p49
      %p51 = scmp.ne.s32.totalorder %s40, %s41
      %p52 = scmp.eq.s32.totalorder %s32, 0
      %p53 = por %p51, %p52
      %p54 = scmp.ne.s32.totalorder %s40, %s41
      %p55 = scmp.eq.s32.totalorder %s33, 1
      %p56 = por %p54, %p55
      %p58 = scmp.ne.s32.totalorder %s41, %s57
      %p59 = scmp.eq.s32.totalorder %s33, 0
      %p60 = por %p58, %p59
      %s62 = sadd.s32 %s61, 1
      %p65 = scmp.eq.s32.totalorder %s27, 1
      %p66 = scmp.ne.s32.totalorder %s61, %s63
      %p67 = scmp.eq.s32.totalorder %s27, 0
      %p68 = por %p66, %p67
      %p69 = scmp.ne.s32.totalorder %s61, %s63
      %p70 = scmp.eq.s32.totalorder %s32, 1
      %p71 = por %p69, %p70
      %p72 = scmp.ne.s32.totalorder %s63, %s64
      %p73 = scmp.eq.s32.totalorder %s32, 0
      %p74 = por %p72, %p73
      %p75 = scmp.ne.s32.totalorder %s63, %s64
      %p76 = scmp.eq.s32.totalorder %s33, 1
      %p77 = por %p75, %p76
      %p79 = scmp.ne.s32.totalorder %s64, %s78
      %p80 = scmp.eq.s32.totalorder %s33, 0
      %p81 = por %p79, %p80
      %s83 = sadd.s32 %s82, 1
      %p86 = scmp.eq.s32.totalorder %s27, 1
      %p87 = scmp.ne.s32.totalorder %s82, %s84
      %p88 = scmp.eq.s32.totalorder %s27, 0
      %p89 = por %p87, %p88
      %p90 = scmp.ne.s32.totalorder %s82, %s84
      %p91 = scmp.eq.s32.totalorder %s32, 1
      %p92 = por %p90, %p91
      %p93 = scmp.ne.s32.totalorder %s84, %s85
      %p94 = scmp.eq.s32.totalorder %s32, 0
      %p95 = por %p93, %p94
      %p96 = scmp.ne.s32.totalorder %s84, %s85
      %p97 = scmp.eq.s32.totalorder %s33, 1
      %p98 = por %p96, %p97
      %p100 = scmp.ne.s32.totalorder %s85, %s99
      %p101 = scmp.eq.s32.totalorder %s33, 0
      %p102 = por %p100, %p101
      %s104 = sadd.s32 %s103, 1
      %p107 = scmp.eq.s32.totalorder %s27, 1
      %p108 = scmp.ne.s32.totalorder %s103, %s105
      %p109 = scmp.eq.s32.totalorder %s27, 0
      %p110 = por %p108, %p109
      %p111 = scmp.ne.s32.totalorder %s103, %s105
      %p112 = scmp.eq.s32.totalorder %s32, 1
      %p113 = por %p111, %p112
      %p114 = scmp.ne.s32.totalorder %s105, %s106
      %p115 = scmp.eq.s32.totalorder %s32, 0
      %p116 = por %p114, %p115
      %p117 = scmp.ne.s32.totalorder %s105, %s106
      %p118 = scmp.eq.s32.totalorder %s33, 1
      %p119 = por %p117, %p118
      %p121 = scmp.ne.s32.totalorder %s106, %s120
      %p122 = scmp.eq.s32.totalorder %s33, 0
      %p123 = por %p121, %p122
      %s125 = sadd.s32 %s124, 1
      %p128 = scmp.eq.s32.totalorder %s27, 1
      %p129 = scmp.ne.s32.totalorder %s124, %s126
      %p130 = scmp.eq.s32.totalorder %s27, 0
      %p131 = por %p129, %p130
      %p132 = scmp.ne.s32.totalorder %s124, %s126
      %p133 = scmp.eq.s32.totalorder %s32, 1
      %p134 = por %p132, %p133
      %p135 = scmp.ne.s32.totalorder %s126, %s127
      %p136 = scmp.eq.s32.totalorder %s32, 0
      %p137 = por %p135, %p136
      %p138 = scmp.ne.s32.totalorder %s126, %s127
      %p139 = scmp.eq.s32.totalorder %s33, 1
      %p140 = por %p138, %p139
      %p142 = scmp.ne.s32.totalorder %s127, %s141
      %p143 = scmp.eq.s32.totalorder %s33, 0
      %p144 = por %p142, %p143
      %s146 = sadd.s32 %s145, 1
      %p149 = scmp.eq.s32.totalorder %s27, 1
      %p150 = scmp.ne.s32.totalorder %s145, %s147
      %p151 = scmp.eq.s32.totalorder %s27, 0
      %p152 = por %p150, %p151
      %p153 = scmp.ne.s32.totalorder %s145, %s147
      %p154 = scmp.eq.s32.totalorder %s32, 1
      %p155 = por %p153, %p154
      %p156 = scmp.ne.s32.totalorder %s147, %s148
      %p157 = scmp.eq.s32.totalorder %s32, 0
      %p158 = por %p156, %p157
      %p159 = scmp.ne.s32.totalorder %s147, %s148
      %p160 = scmp.eq.s32.totalorder %s33, 1
      %p161 = por %p159, %p160
      %p163 = scmp.ne.s32.totalorder %s148, %s162
      %p164 = scmp.eq.s32.totalorder %s33, 0
      %p165 = por %p163, %p164
      %s167 = sadd.s32 %s166, 1
      %p170 = scmp.eq.s32.totalorder %s27, 1
      %p171 = scmp.ne.s32.totalorder %s166, %s168
      %p172 = scmp.eq.s32.totalorder %s27, 0
      %p173 = por %p171, %p172
      %p174 = scmp.ne.s32.totalorder %s166, %s168
      %p175 = scmp.eq.s32.totalorder %s32, 1
      %p176 = por %p174, %p175
      %p177 = scmp.ne.s32.totalorder %s168, %s169
      %p178 = scmp.eq.s32.totalorder %s32, 0
      %p179 = por %p177, %p178
      %p180 = scmp.ne.s32.totalorder %s168, %s169
      %p181 = scmp.eq.s32.totalorder %s33, 1
      %p182 = por %p180, %p181
      %p184 = scmp.ne.s32.totalorder %s169, %s183
      %p185 = scmp.eq.s32.totalorder %s33, 0
      %p186 = por %p184, %p185
      %s188 = sadd.s32 %s187, 1
      %p191 = scmp.eq.s32.totalorder %s27, 1
      %p192 = scmp.ne.s32.totalorder %s187, %s189
      %p193 = scmp.eq.s32.totalorder %s27, 0
      %p194 = por %p192, %p193
      %p195 = scmp.ne.s32.totalorder %s187, %s189
      %p196 = scmp.eq.s32.totalorder %s32, 1
      %p197 = por %p195, %p196
      %p198 = scmp.ne.s32.totalorder %s189, %s190
      %p199 = scmp.eq.s32.totalorder %s32, 0
      %p200 = por %p198, %p199
      %p201 = scmp.ne.s32.totalorder %s189, %s190
      %p202 = scmp.eq.s32.totalorder %s33, 1
      %p203 = por %p201, %p202
      %p205 = scmp.ne.s32.totalorder %s190, %s204
      %p206 = scmp.eq.s32.totalorder %s33, 0
      %p207 = por %p205, %p206
      %s209 = sadd.s32 %s208, 1
      %p212 = scmp.eq.s32.totalorder %s27, 1
      %p213 = scmp.ne.s32.totalorder %s208, %s210
      %p214 = scmp.eq.s32.totalorder %s27, 0
      %p215 = por %p213, %p214
      %p216 = scmp.ne.s32.totalorder %s208, %s210
      %p217 = scmp.eq.s32.totalorder %s32, 1
      %p218 = por %p216, %p217
      %p219 = scmp.ne.s32.totalorder %s210, %s211
      %p220 = scmp.eq.s32.totalorder %s32, 0
      %p221 = por %p219, %p220
      %p222 = scmp.ne.s32.totalorder %s210, %s211
      %p223 = scmp.eq.s32.totalorder %s33, 1
      %p224 = por %p222, %p223
      %p226 = scmp.ne.s32.totalorder %s211, %s225
      %p227 = scmp.eq.s32.totalorder %s33, 0
      %p228 = por %p226, %p227
      %s230 = sadd.s32 %s229, 1
      %p233 = scmp.eq.s32.totalorder %s27, 1
      %p234 = scmp.ne.s32.totalorder %s229, %s231
      %p235 = scmp.eq.s32.totalorder %s27, 0
      %p236 = por %p234, %p235
      %p237 = scmp.ne.s32.totalorder %s229, %s231
      %p238 = scmp.eq.s32.totalorder %s32, 1
      %p239 = por %p237, %p238
      %p240 = scmp.ne.s32.totalorder %s231, %s232
      %p241 = scmp.eq.s32.totalorder %s32, 0
      %p242 = por %p240, %p241
      %p243 = scmp.ne.s32.totalorder %s231, %s232
      %p244 = scmp.eq.s32.totalorder %s33, 1
      %p245 = por %p243, %p244
      %p247 = scmp.ne.s32.totalorder %s232, %s246
      %p248 = scmp.eq.s32.totalorder %s33, 0
      %p249 = por %p247, %p248
      %s251 = sadd.s32 %s250, 1
      %p254 = scmp.eq.s32.totalorder %s27, 1
      %p255 = scmp.ne.s32.totalorder %s250, %s252
      %p256 = scmp.eq.s32.totalorder %s27, 0
      %p257 = por %p255, %p256
      %p258 = scmp.ne.s32.totalorder %s250, %s252
      %p259 = scmp.eq.s32.totalorder %s32, 1
      %p260 = por %p258, %p259
      %p261 = scmp.ne.s32.totalorder %s252, %s253
      %p262 = scmp.eq.s32.totalorder %s32, 0
      %p263 = por %p261, %p262
      %p264 = scmp.ne.s32.totalorder %s252, %s253
      %p265 = scmp.eq.s32.totalorder %s33, 1
      %p266 = por %p264, %p265
      %p268 = scmp.ne.s32.totalorder %s253, %s267
      %p269 = scmp.eq.s32.totalorder %s33, 0
      %p270 = por %p268, %p269
      %s272 = sadd.s32 %s271, 1
      %p275 = scmp.eq.s32.totalorder %s27, 1
      %p276 = scmp.ne.s32.totalorder %s271, %s273
      %p277 = scmp.eq.s32.totalorder %s27, 0
      %p278 = por %p276, %p277
      %p279 = scmp.ne.s32.totalorder %s271, %s273
      %p280 = scmp.eq.s32.totalorder %s32, 1
      %p281 = por %p279, %p280
      %p282 = scmp.ne.s32.totalorder %s273, %s274
      %p283 = scmp.eq.s32.totalorder %s32, 0
      %p284 = por %p282, %p283
      %p285 = scmp.ne.s32.totalorder %s273, %s274
      %p286 = scmp.eq.s32.totalorder %s33, 1
      %p287 = por %p285, %p286
      %p289 = scmp.ne.s32.totalorder %s274, %s288
      %p290 = scmp.eq.s32.totalorder %s33, 0
      %p291 = por %p289, %p290
      %s293 = sadd.s32 %s292, 1
      %p296 = scmp.eq.s32.totalorder %s27, 1
      %p297 = scmp.ne.s32.totalorder %s292, %s294
      %p298 = scmp.eq.s32.totalorder %s27, 0
      %p299 = por %p297, %p298
      %p300 = scmp.ne.s32.totalorder %s292, %s294
      %p301 = scmp.eq.s32.totalorder %s32, 1
      %p302 = por %p300, %p301
      %p303 = scmp.ne.s32.totalorder %s294, %s295
      %p304 = scmp.eq.s32.totalorder %s32, 0
      %p305 = por %p303, %p304
      %p306 = scmp.ne.s32.totalorder %s294, %s295
      %p307 = scmp.eq.s32.totalorder %s33, 1
      %p308 = por %p306, %p307
      %p310 = scmp.ne.s32.totalorder %s295, %s309
      %p311 = scmp.eq.s32.totalorder %s33, 0
      %p312 = por %p310, %p311
      %s314 = sadd.s32 %s313, 1
      %p317 = scmp.eq.s32.totalorder %s27, 1
      %p318 = scmp.ne.s32.totalorder %s313, %s315
      %p319 = scmp.eq.s32.totalorder %s27, 0
      %p320 = por %p318, %p319
      %p321 = scmp.ne.s32.totalorder %s313, %s315
      %p322 = scmp.eq.s32.totalorder %s32, 1
      %p323 = por %p321, %p322
      %p324 = scmp.ne.s32.totalorder %s315, %s316
      %p325 = scmp.eq.s32.totalorder %s32, 0
      %p326 = por %p324, %p325
      %p327 = scmp.ne.s32.totalorder %s315, %s316
      %p328 = scmp.eq.s32.totalorder %s33, 1
      %p329 = por %p327, %p328
      %p331 = scmp.ne.s32.totalorder %s316, %s330
      %p332 = scmp.eq.s32.totalorder %s33, 0
      %p333 = por %p331, %p332
      %s335 = sadd.s32 %s334, 1
      %p338 = scmp.eq.s32.totalorder %s27, 1
      %p339 = scmp.ne.s32.totalorder %s334, %s336
      %p340 = scmp.eq.s32.totalorder %s27, 0
      %p341 = por %p339, %p340
      %p342 = scmp.ne.s32.totalorder %s334, %s336
      %p343 = scmp.eq.s32.totalorder %s32, 1
      %p344 = por %p342, %p343
      %p345 = scmp.ne.s32.totalorder %s336, %s337
      %p346 = scmp.eq.s32.totalorder %s32, 0
      %p347 = por %p345, %p346
      %p348 = scmp.ne.s32.totalorder %s336, %s337
      %p349 = scmp.eq.s32.totalorder %s33, 1
      %p350 = por %p348, %p349
      %p352 = scmp.ne.s32.totalorder %s337, %s351
      %p353 = scmp.eq.s32.totalorder %s33, 0
      %p354 = por %p352, %p353
      %s356 = sadd.s32 %s355, 1
      %p359 = scmp.eq.s32.totalorder %s27, 1
      %p360 = scmp.ne.s32.totalorder %s355, %s357
      %p361 = scmp.eq.s32.totalorder %s27, 0
      %p362 = por %p360, %p361
      %p363 = scmp.ne.s32.totalorder %s355, %s357
      %p364 = scmp.eq.s32.totalorder %s32, 1
      %p365 = por %p363, %p364
      %p366 = scmp.ne.s32.totalorder %s357, %s358
      %p367 = scmp.eq.s32.totalorder %s32, 0
      %p368 = por %p366, %p367
      %p369 = scmp.ne.s32.totalorder %s357, %s358
      %p370 = scmp.eq.s32.totalorder %s33, 1
      %p371 = por %p369, %p370
      %p373 = scmp.ne.s32.totalorder %s358, %s372
      %p374 = scmp.eq.s32.totalorder %s33, 0
      %p375 = por %p373, %p374
      %s377 = sadd.s32 %s376, 1
      %p380 = scmp.eq.s32.totalorder %s27, 1
      %p381 = scmp.ne.s32.totalorder %s376, %s378
      %p382 = scmp.eq.s32.totalorder %s27, 0
      %p383 = por %p381, %p382
      %p384 = scmp.ne.s32.totalorder %s376, %s378
      %p385 = scmp.eq.s32.totalorder %s32, 1
      %p386 = por %p384, %p385
      %p387 = scmp.ne.s32.totalorder %s378, %s379
      %p388 = scmp.eq.s32.totalorder %s32, 0
      %p389 = por %p387, %p388
      %p390 = scmp.ne.s32.totalorder %s378, %s379
      %p391 = scmp.eq.s32.totalorder %s33, 1
      %p392 = por %p390, %p391
      %p394 = scmp.ne.s32.totalorder %s379, %s393
      %p395 = scmp.eq.s32.totalorder %s33, 0
      %p396 = por %p394, %p395
      %s397 = ssub.s32 %s27, %s34
      %p398 = scmp.eq.s32.totalorder %s397, 0
      %s400 = sadd.s32 %s399, 1
      %s401 = scalar_select %p398, %s399, %s400
      %p404 = pneg %p398
      %p405 = scmp.eq.s32.totalorder %s27, 1
      %p406 = por %p404, %p405
      %p407 = scmp.ne.s32.totalorder %s399, %s402
      %p408 = scmp.eq.s32.totalorder %s27, 0
      %p409 = por %p407, %p408
      %p410 = scmp.ne.s32.totalorder %s399, %s402
      %p411 = scmp.eq.s32.totalorder %s32, 1
      %p412 = por %p410, %p411
      %p413 = scmp.ne.s32.totalorder %s402, %s403
      %p414 = scmp.eq.s32.totalorder %s32, 0
      %p415 = por %p413, %p414
      %p416 = scmp.ne.s32.totalorder %s402, %s403
      %p417 = scmp.eq.s32.totalorder %s33, 1
      %p418 = por %p416, %p417
      %p420 = scmp.ne.s32.totalorder %s403, %s419
      %p421 = scmp.eq.s32.totalorder %s33, 0
      %p422 = por %p420, %p421
      %s423 = ssub.s32 %s27, %s34
      %p424 = scmp.eq.s32.totalorder %s423, 0
      %s426 = sadd.s32 %s425, 1
      %s427 = scalar_select %p424, %s425, %s426
      %p430 = pneg %p424
      %p431 = scmp.eq.s32.totalorder %s27, 1
      %p432 = por %p430, %p431
      %p433 = scmp.ne.s32.totalorder %s425, %s428
      %p434 = scmp.eq.s32.totalorder %s27, 0
      %p435 = por %p433, %p434
      %p436 = scmp.ne.s32.totalorder %s425, %s428
      %p437 = scmp.eq.s32.totalorder %s32, 1
      %p438 = por %p436, %p437
      %p439 = scmp.ne.s32.totalorder %s428, %s429
      %p440 = scmp.eq.s32.totalorder %s32, 0
      %p441 = por %p439, %p440
      %p442 = scmp.ne.s32.totalorder %s428, %s429
      %p443 = scmp.eq.s32.totalorder %s33, 1
      %p444 = por %p442, %p443
      %p446 = scmp.ne.s32.totalorder %s429, %s445
      %p447 = scmp.eq.s32.totalorder %s33, 0
      %p448 = por %p446, %p447
      %p449 = scmp.le.s32.totalorder 1, %s27
      %p450 = scmp.lt.s32.totalorder %s27, 3
      %p451 = pnand %p449, %p450
      %p452 = pneg %p451
      // Predicated region
      $region9: #{mmd_vae_forward.1} parent=5 // pred_check
        _
      $region10: #{mmd_vae_forward.1} parent=5 // pred_check_branch
        %454 = sbr.rel (%p451) target = $region12
      $region11: #{mmd_vae_forward.1} parent=5 // pred_region
        %s455 = ssub.s32 %s27, 1
        // Predicated region
        $region13: #{mmd_vae_forward.1} parent=11 // pred_check
          %p456 = pneg %p74
        $region14: #{mmd_vae_forward.1} parent=11 // pred_check_branch
          %458 = sbr.rel (%p456) target = $region16
        $region15: #{mmd_vae_forward.1} parent=11 // pred_region
          _
        $region16: #{mmd_vae_forward.1} parent=11 // pred_fallthru
          _
        // Predicated region
        $region17: #{mmd_vae_forward.1} parent=11 // pred_check
          %p459 = pneg %p95
        $region18: #{mmd_vae_forward.1} parent=11 // pred_check_branch
          %461 = sbr.rel (%p459) target = $region20
        $region19: #{mmd_vae_forward.1} parent=11 // pred_region
          _
        $region20: #{mmd_vae_forward.1} parent=11 // pred_fallthru
          _
        // Predicated region
        $region21: #{mmd_vae_forward.1} parent=11 // pred_check
          %p462 = pneg %p116
        $region22: #{mmd_vae_forward.1} parent=11 // pred_check_branch
          %464 = sbr.rel (%p462) target = $region24
        $region23: #{mmd_vae_forward.1} parent=11 // pred_region
          _
        $region24: #{mmd_vae_forward.1} parent=11 // pred_fallthru
          _
        // Predicated region
        $region25: #{mmd_vae_forward.1} parent=11 // pred_check
          %p465 = pneg %p137
        $region26: #{mmd_vae_forward.1} parent=11 // pred_check_branch
          %467 = sbr.rel (%p465) target = $region28
        $region27: #{mmd_vae_forward.1} parent=11 // pred_region
          _
        $region28: #{mmd_vae_forward.1} parent=11 // pred_fallthru
          _
        // Predicated region
        $region29: #{mmd_vae_forward.1} parent=11 // pred_check
          %p468 = pneg %p158
        $region30: #{mmd_vae_forward.1} parent=11 // pred_check_branch
          %470 = sbr.rel (%p468) target = $region32
        $region31: #{mmd_vae_forward.1} parent=11 // pred_region
          _
        $region32: #{mmd_vae_forward.1} parent=11 // pred_fallthru
          _
        // Predicated region
        $region33: #{mmd_vae_forward.1} parent=11 // pred_check
          %p471 = pneg %p179
        $region34: #{mmd_vae_forward.1} parent=11 // pred_check_branch
          %473 = sbr.rel (%p471) target = $region36
        $region35: #{mmd_vae_forward.1} parent=11 // pred_region
          %475 = vsyncadd [#allocation3], 0
          %s477 = sshll.u32 %s6, 4
          %s478 = int_to_ptr.hbm [resolvable:$true] %s477
          %s479 = sshll.u32 [#allocation2], 4
          %s480 = int_to_ptr.vmem [resolvable:$true] %s479
          %482 = dma.hbm_to_vmem [thread:$0]  %s478, 16, %s480, [#allocation3]
        $region36: #{mmd_vae_forward.1} parent=11 // pred_fallthru
          _
        // Predicated region
        $region37: #{mmd_vae_forward.1} parent=11 // pred_check
          %p483 = pneg %p200
        $region38: #{mmd_vae_forward.1} parent=11 // pred_check_branch
          %485 = sbr.rel (%p483) target = $region40
        $region39: #{mmd_vae_forward.1} parent=11 // pred_region
          _
        $region40: #{mmd_vae_forward.1} parent=11 // pred_fallthru
          _
        // Predicated region
        $region41: #{mmd_vae_forward.1} parent=11 // pred_check
          %p486 = pneg %p221
        $region42: #{mmd_vae_forward.1} parent=11 // pred_check_branch
          %488 = sbr.rel (%p486) target = $region44
        $region43: #{mmd_vae_forward.1} parent=11 // pred_region
          _
        $region44: #{mmd_vae_forward.1} parent=11 // pred_fallthru
          _
        // Predicated region
        $region45: #{mmd_vae_forward.1} parent=11 // pred_check
          %p489 = pneg %p242
        $region46: #{mmd_vae_forward.1} parent=11 // pred_check_branch
          %491 = sbr.rel (%p489) target = $region48
        $region47: #{mmd_vae_forward.1} parent=11 // pred_region
          _
        $region48: #{mmd_vae_forward.1} parent=11 // pred_fallthru
          _
        // Predicated region
        $region49: #{mmd_vae_forward.1} parent=11 // pred_check
          %p492 = pneg %p263
        $region50: #{mmd_vae_forward.1} parent=11 // pred_check_branch
          %494 = sbr.rel (%p492) target = $region52
        $region51: #{mmd_vae_forward.1} parent=11 // pred_region
          _
        $region52: #{mmd_vae_forward.1} parent=11 // pred_fallthru
          _
        // Predicated region
        $region53: #{mmd_vae_forward.1} parent=11 // pred_check
          %p495 = pneg %p284
        $region54: #{mmd_vae_forward.1} parent=11 // pred_check_branch
          %497 = sbr.rel (%p495) target = $region56
        $region55: #{mmd_vae_forward.1} parent=11 // pred_region
          _
        $region56: #{mmd_vae_forward.1} parent=11 // pred_fallthru
          _
        // Predicated region
        $region57: #{mmd_vae_forward.1} parent=11 // pred_check
          %p498 = pneg %p305
        $region58: #{mmd_vae_forward.1} parent=11 // pred_check_branch
          %500 = sbr.rel (%p498) target = $region60
        $region59: #{mmd_vae_forward.1} parent=11 // pred_region
          _
        $region60: #{mmd_vae_forward.1} parent=11 // pred_fallthru
          _
        // Predicated region
        $region61: #{mmd_vae_forward.1} parent=11 // pred_check
          %p501 = pneg %p326
        $region62: #{mmd_vae_forward.1} parent=11 // pred_check_branch
          %503 = sbr.rel (%p501) target = $region64
        $region63: #{mmd_vae_forward.1} parent=11 // pred_region
          %505 = vsyncadd [#allocation5], 0
          %s506 = sshll.u32 %s13, 4
          %s507 = int_to_ptr.hbm [resolvable:$true] %s506
          %s508 = sshll.u32 [#allocation4], 4
          %s509 = int_to_ptr.vmem [resolvable:$true] %s508
          %514 = dma.hbm_to_vmem [thread:$0]  %s507, 1024, %s509, [#allocation5], 64, 64, 4
        $region64: #{mmd_vae_forward.1} parent=11 // pred_fallthru
          _
        // Predicated region
        $region65: #{mmd_vae_forward.1} parent=11 // pred_check
          %p515 = pneg %p347
        $region66: #{mmd_vae_forward.1} parent=11 // pred_check_branch
          %517 = sbr.rel (%p515) target = $region68
        $region67: #{mmd_vae_forward.1} parent=11 // pred_region
          _
        $region68: #{mmd_vae_forward.1} parent=11 // pred_fallthru
          _
        // Predicated region
        $region69: #{mmd_vae_forward.1} parent=11 // pred_check
          %p518 = pneg %p368
        $region70: #{mmd_vae_forward.1} parent=11 // pred_check_branch
          %520 = sbr.rel (%p518) target = $region72
        $region71: #{mmd_vae_forward.1} parent=11 // pred_region
          _
        $region72: #{mmd_vae_forward.1} parent=11 // pred_fallthru
          _
        // Predicated region
        $region73: #{mmd_vae_forward.1} parent=11 // pred_check
          %p521 = pneg %p389
        $region74: #{mmd_vae_forward.1} parent=11 // pred_check_branch
          %523 = sbr.rel (%p521) target = $region76
        $region75: #{mmd_vae_forward.1} parent=11 // pred_region
          _
        $region76: #{mmd_vae_forward.1} parent=11 // pred_fallthru
          _
      $region12: #{mmd_vae_forward.1} parent=5 // pred_fallthru
        _
      %p524 = scmp.lt.s32.totalorder %s27, 2
      // Predicated region
      $region77: #{mmd_vae_forward.1} parent=5 // pred_check
        %p525 = pneg %p524
      $region78: #{mmd_vae_forward.1} parent=5 // pred_check_branch
        %527 = sbr.rel (%p525) target = $region80
      $region79: #{mmd_vae_forward.1} parent=5 // pred_region
        // Predicated region
        $region81: #{mmd_vae_forward.1} parent=79 // pred_check
          %p528 = pneg %p47
        $region82: #{mmd_vae_forward.1} parent=79 // pred_check_branch
          %530 = sbr.rel (%p528) target = $region84
        $region83: #{mmd_vae_forward.1} parent=79 // pred_region
          %p531 = scmp.lt.s32.totalorder %s27, 1
          %s532 = scalar_select %p531, %s27, 1
          %s533 = smul.addr %s532, 8
          %s534 = scalar_lea.vmem %s0, %s533
        $region84: #{mmd_vae_forward.1} parent=79 // pred_fallthru
          _
      $region80: #{mmd_vae_forward.1} parent=5 // pred_fallthru
        _
      %p535 = scmp.le.s32.totalorder 1, %s27
      %p536 = scmp.lt.s32.totalorder %s27, 3
      %p537 = pnand %p535, %p536
      %p538 = pneg %p537
      // Predicated region
      $region85: #{mmd_vae_forward.1} parent=5 // pred_check
        _
      $region86: #{mmd_vae_forward.1} parent=5 // pred_check_branch
        %540 = sbr.rel (%p537) target = $region88
      $region87: #{mmd_vae_forward.1} parent=5 // pred_region
        %s541 = ssub.s32 %s27, 1
        // Predicated region
        $region89: #{mmd_vae_forward.1} parent=87 // pred_check
          %p542 = pneg %p179
        $region90: #{mmd_vae_forward.1} parent=87 // pred_check_branch
          %544 = sbr.rel (%p542) target = $region92
        $region91: #{mmd_vae_forward.1} parent=87 // pred_region
          %546 = dma.done [#allocation3], 16
        $region92: #{mmd_vae_forward.1} parent=87 // pred_fallthru
          _
        // Predicated region
        $region93: #{mmd_vae_forward.1} parent=87 // pred_check
          %p547 = pneg %p326
        $region94: #{mmd_vae_forward.1} parent=87 // pred_check_branch
          %549 = sbr.rel (%p547) target = $region96
        $region95: #{mmd_vae_forward.1} parent=87 // pred_region
          %551 = dma.done [#allocation5], 1024
        $region96: #{mmd_vae_forward.1} parent=87 // pred_fallthru
          _
        %p552 = scmp.lt.s32.totalorder %s32, 1
        %s553 = scalar_select %p552, %s32, 1
        %s554 = smul.addr %s553, 8
        %s555 = scalar_lea.vmem %s0, %s554
        %p556 = pneg %p53
        %p557 = pneg %p50
        %p558 = pneg %p74
        %p559 = pneg %p71
        %p560 = pneg %p95
        %p561 = pneg %p92
        %p562 = pneg %p116
        %p563 = pneg %p113
        %p564 = pneg %p137
        %p565 = pneg %p134
        %p566 = pneg %p158
        %p567 = pneg %p155
        %p568 = pneg %p179
        %p569 = pneg %p176
        %p570 = pneg %p200
        %p571 = pneg %p197
        %p572 = pneg %p221
        %p573 = pneg %p218
        %p574 = pneg %p242
        %p575 = pneg %p239
        %p576 = pneg %p263
        %p577 = pneg %p260
        %p578 = pneg %p284
        %p579 = pneg %p281
        %p580 = pneg %p305
        %p581 = pneg %p302
        %p582 = pneg %p326
        %p583 = pneg %p323
        %p584 = pneg %p347
        %p585 = pneg %p344
        %p586 = pneg %p368
        %p587 = pneg %p365
        %p588 = pneg %p389
        %p589 = pneg %p386
        %p590 = pneg %p415
        %p591 = pneg %p412
        %p592 = scmp.lt.s32.totalorder %s32, 1
        %s593 = scalar_select %p592, %s32, 1
        %s594 = smul.addr %s593, 8
        %s595 = scalar_lea.vmem %s17, %s594
        %p596 = pneg %p441
        %p597 = pneg %p438
        %p598 = scmp.lt.s32.totalorder %s32, 1
        %s599 = scalar_select %p598, %s32, 1
        %s600 = smul.addr %s599, 8
        %s601 = scalar_lea.vmem %s18, %s600
        %p602 = scmp.lt.s32.totalorder %s32, 1
        %s603 = scalar_select %p602, %s32, 1
        %s604 = smul.addr %s603, 8
        %s605 = scalar_lea.vmem %s0, %s604
        %p606 = scmp.lt.s32.totalorder %s32, 1
        %s607 = scalar_select %p606, %s32, 1
        %s608 = smul.addr %s607, 8
        %s609 = scalar_lea.vmem %s17, %s608
        %p610 = scmp.lt.s32.totalorder %s32, 1
        %s611 = scalar_select %p610, %s32, 1
        %s612 = smul.addr %s611, 8
        %s613 = scalar_lea.vmem %s18, %s612
        %v615 = vld [vmem:[%s605] sm:$0xff]
        %v616 = vld [vmem:[%s1] sm:$0xf]
        %v617 = vld [vmem:[%s1 + $0x4] sm:$0xf]
        %v618 = vld [vmem:[%s1 + $0x8] sm:$0xf]
        %v619 = vld [vmem:[%s1 + $0xc] sm:$0xf]
        %v620 = vpack.c.bf16 %v615, %v615
        %v621 = vld [vmem:[%s2] sm:$0x1]
        %v623 = vperm.slane %v621, 0
        %v629 = vunpack.c.l.b16 %v616
        %v630 = vunpack.c.l.b16 %v617
        %v631 = vunpack.c.l.b16 %v618
        %v632 = vunpack.c.l.b16 %v619
        %v633 = vpack.c.b16 %v630, %v629
        %v634 = vpack.c.b16 %v632, %v631
        %vm637 = vcmask 261120
        %v639 = vsel %vm637, %v620, 0
        %641 = vmatpush.bf16.msra.mxu0 0
        %642 = vmatpush.bf16.msra.mxu0 0
        %643 = vmatpush.bf16.msra.mxu0 0
        %644 = vmatpush.bf16.msra.mxu0 0
        %645 = vmatpush.bf16.msra.mxu0 0
        %646 = vmatpush.bf16.msra.mxu0 0
        %647 = vmatpush.bf16.msra.mxu0 %v634
        %648 = vmatpush.bf16.msra.mxu0 %v633
        %649 = vmatmul.bf16.gmra.mxu0 %v639
        %v650 = vpop.f32.mrf.mxu0
        %v651 = vadd.f32 %v623, %v650
        %v652 = vpop.f32.mrf.mxu0
        %653 = vdwg.mxu0
        %vm654 = vcmp.gt.f32.partialorder %v651, 0.0
        %v655 = vmul.f32 %v651, 0.2
        %v656 = vsel %vm654, %v651, %v655
        %v657 = vld [vmem:[%s3] sm:$0xf]
        %v658 = vld [vmem:[%s3 + $0x4] sm:$0xf]
        %v659 = vld [vmem:[%s3 + $0x8] sm:$0xf]
        %v660 = vld [vmem:[%s3 + $0xc] sm:$0xf]
        %v661 = vld [vmem:[%s3 + $0x10] sm:$0xf]
        %v662 = vld [vmem:[%s3 + $0x14] sm:$0xf]
        %v663 = vld [vmem:[%s3 + $0x18] sm:$0xf]
        %v664 = vld [vmem:[%s3 + $0x1c] sm:$0xf]
        %v665 = vld [vmem:[%s3 + $0x20] sm:$0xf]
        %v666 = vld [vmem:[%s3 + $0x24] sm:$0xf]
        %v667 = vld [vmem:[%s3 + $0x28] sm:$0xf]
        %v668 = vld [vmem:[%s3 + $0x2c] sm:$0xf]
        %v669 = vld [vmem:[%s3 + $0x30] sm:$0xf]
        %v670 = vld [vmem:[%s3 + $0x34] sm:$0xf]
        %v671 = vld [vmem:[%s3 + $0x38] sm:$0xf]
        %v672 = vld [vmem:[%s3 + $0x3c] sm:$0xf]
        %v673 = vpack.c.bf16 %v656, %v656
        %v674 = vld [vmem:[%s4] sm:$0x1]
        %v676 = vperm.slane %v674, 0
        %v694 = vunpack.c.l.b16 %v657
        %v695 = vunpack.c.l.b16 %v658
        %v696 = vunpack.c.l.b16 %v659
        %v697 = vunpack.c.l.b16 %v660
        %v698 = vunpack.c.l.b16 %v661
        %v699 = vunpack.c.l.b16 %v662
        %v700 = vunpack.c.l.b16 %v663
        %v701 = vunpack.c.l.b16 %v664
        %v702 = vunpack.c.l.b16 %v665
        %v703 = vunpack.c.l.b16 %v666
        %v704 = vunpack.c.l.b16 %v667
        %v705 = vunpack.c.l.b16 %v668
        %v706 = vunpack.c.l.b16 %v669
        %v707 = vunpack.c.l.b16 %v670
        %v708 = vunpack.c.l.b16 %v671
        %v709 = vunpack.c.l.b16 %v672
        %v710 = vpack.c.b16 %v695, %v694
        %v711 = vpack.c.b16 %v697, %v696
        %v712 = vpack.c.b16 %v699, %v698
        %v713 = vpack.c.b16 %v701, %v700
        %v714 = vpack.c.b16 %v703, %v702
        %v715 = vpack.c.b16 %v705, %v704
        %v716 = vpack.c.b16 %v707, %v706
        %v717 = vpack.c.b16 %v709, %v708
        %726 = vmatpush.bf16.msra.mxu0 %v717
        %727 = vmatpush.bf16.msra.mxu0 %v716
        %728 = vmatpush.bf16.msra.mxu0 %v715
        %729 = vmatpush.bf16.msra.mxu0 %v714
        %730 = vmatpush.bf16.msra.mxu0 %v713
        %731 = vmatpush.bf16.msra.mxu0 %v712
        %732 = vmatpush.bf16.msra.mxu0 %v711
        %733 = vmatpush.bf16.msra.mxu0 %v710
        %734 = vmatmul.bf16.gmra.mxu0 %v673
        %v735 = vpop.f32.mrf.mxu0
        %v736 = vadd.f32 %v676, %v735
        %v737 = vpop.f32.mrf.mxu0
        %738 = vdwg.mxu0
        %vm739 = vcmp.gt.f32.partialorder %v736, 0.0
        %v740 = vmul.f32 %v736, 0.2
        %v741 = vsel %vm739, %v736, %v740
        %v742 = vld [vmem:[%s5] sm:$0xf]
        %v743 = vld [vmem:[%s5 + $0x4] sm:$0xf]
        %v744 = vld [vmem:[%s5 + $0x8] sm:$0xf]
        %v745 = vld [vmem:[%s5 + $0xc] sm:$0xf]
        %v746 = vld [vmem:[%s5 + $0x10] sm:$0xf]
        %v747 = vld [vmem:[%s5 + $0x14] sm:$0xf]
        %v748 = vld [vmem:[%s5 + $0x18] sm:$0xf]
        %v749 = vld [vmem:[%s5 + $0x1c] sm:$0xf]
        %v750 = vld [vmem:[%s5 + $0x20] sm:$0xf]
        %v751 = vld [vmem:[%s5 + $0x24] sm:$0xf]
        %v752 = vld [vmem:[%s5 + $0x28] sm:$0xf]
        %v753 = vld [vmem:[%s5 + $0x2c] sm:$0xf]
        %v754 = vld [vmem:[%s5 + $0x30] sm:$0xf]
        %v755 = vld [vmem:[%s5 + $0x34] sm:$0xf]
        %v756 = vld [vmem:[%s5 + $0x38] sm:$0xf]
        %v757 = vld [vmem:[%s5 + $0x3c] sm:$0xf]
        %v758 = vpack.c.bf16 %v741, %v741
        %v759 = vld [vmem:[#allocation2] sm:$0x1]
        %v761 = vperm.slane %v759, 0
        %v779 = vunpack.c.l.b16 %v742
        %v780 = vunpack.c.l.b16 %v743
        %v781 = vunpack.c.l.b16 %v744
        %v782 = vunpack.c.l.b16 %v745
        %v783 = vunpack.c.l.b16 %v746
        %v784 = vunpack.c.l.b16 %v747
        %v785 = vunpack.c.l.b16 %v748
        %v786 = vunpack.c.l.b16 %v749
        %v787 = vunpack.c.l.b16 %v750
        %v788 = vunpack.c.l.b16 %v751
        %v789 = vunpack.c.l.b16 %v752
        %v790 = vunpack.c.l.b16 %v753
        %v791 = vunpack.c.l.b16 %v754
        %v792 = vunpack.c.l.b16 %v755
        %v793 = vunpack.c.l.b16 %v756
        %v794 = vunpack.c.l.b16 %v757
        %v795 = vpack.c.b16 %v780, %v779
        %v796 = vpack.c.b16 %v782, %v781
        %v797 = vpack.c.b16 %v784, %v783
        %v798 = vpack.c.b16 %v786, %v785
        %v799 = vpack.c.b16 %v788, %v787
        %v800 = vpack.c.b16 %v790, %v789
        %v801 = vpack.c.b16 %v792, %v791
        %v802 = vpack.c.b16 %v794, %v793
        %811 = vmatpush.bf16.msra.mxu0 %v802
        %812 = vmatpush.bf16.msra.mxu0 %v801
        %813 = vmatpush.bf16.msra.mxu0 %v800
        %814 = vmatpush.bf16.msra.mxu0 %v799
        %815 = vmatpush.bf16.msra.mxu0 %v798
        %816 = vmatpush.bf16.msra.mxu0 %v797
        %817 = vmatpush.bf16.msra.mxu0 %v796
        %818 = vmatpush.bf16.msra.mxu0 %v795
        %819 = vmatmul.bf16.gmra.mxu0 %v758
        %v820 = vpop.f32.mrf.mxu0
        %v821 = vadd.f32 %v761, %v820
        %v822 = vpop.f32.mrf.mxu0
        %823 = vdwg.mxu0
        %vm824 = vcmp.gt.f32.partialorder %v821, 0.0
        %v825 = vmul.f32 %v821, 0.2
        %v826 = vsel %vm824, %v821, %v825
        %v827 = vld [vmem:[%s7] sm:$0xf]
        %v828 = vld [vmem:[%s7 + $0x4] sm:$0xf]
        %v829 = vld [vmem:[%s7 + $0x8] sm:$0xf]
        %v830 = vld [vmem:[%s7 + $0xc] sm:$0xf]
        %v831 = vld [vmem:[%s7 + $0x10] sm:$0xf]
        %v832 = vld [vmem:[%s7 + $0x14] sm:$0xf]
        %v833 = vld [vmem:[%s7 + $0x18] sm:$0xf]
        %v834 = vld [vmem:[%s7 + $0x1c] sm:$0xf]
        %v835 = vld [vmem:[%s7 + $0x20] sm:$0xf]
        %v836 = vld [vmem:[%s7 + $0x24] sm:$0xf]
        %v837 = vld [vmem:[%s7 + $0x28] sm:$0xf]
        %v838 = vld [vmem:[%s7 + $0x2c] sm:$0xf]
        %v839 = vld [vmem:[%s7 + $0x30] sm:$0xf]
        %v840 = vld [vmem:[%s7 + $0x34] sm:$0xf]
        %v841 = vld [vmem:[%s7 + $0x38] sm:$0xf]
        %v842 = vld [vmem:[%s7 + $0x3c] sm:$0xf]
        %v843 = vpack.c.bf16 %v826, %v826
        %v844 = vld [vmem:[%s8] sm:$0x1]
        %v846 = vperm.slane %v844, 0
        %v864 = vunpack.c.l.b16 %v827
        %v865 = vunpack.c.l.b16 %v828
        %v866 = vunpack.c.l.b16 %v829
        %v867 = vunpack.c.l.b16 %v830
        %v868 = vunpack.c.l.b16 %v831
        %v869 = vunpack.c.l.b16 %v832
        %v870 = vunpack.c.l.b16 %v833
        %v871 = vunpack.c.l.b16 %v834
        %v872 = vunpack.c.l.b16 %v835
        %v873 = vunpack.c.l.b16 %v836
        %v874 = vunpack.c.l.b16 %v837
        %v875 = vunpack.c.l.b16 %v838
        %v876 = vunpack.c.l.b16 %v839
        %v877 = vunpack.c.l.b16 %v840
        %v878 = vunpack.c.l.b16 %v841
        %v879 = vunpack.c.l.b16 %v842
        %v880 = vpack.c.b16 %v865, %v864
        %v881 = vpack.c.b16 %v867, %v866
        %v882 = vpack.c.b16 %v869, %v868
        %v883 = vpack.c.b16 %v871, %v870
        %v884 = vpack.c.b16 %v873, %v872
        %v885 = vpack.c.b16 %v875, %v874
        %v886 = vpack.c.b16 %v877, %v876
        %v887 = vpack.c.b16 %v879, %v878
        %896 = vmatpush.bf16.msra.mxu0 %v887
        %897 = vmatpush.bf16.msra.mxu0 %v886
        %898 = vmatpush.bf16.msra.mxu0 %v885
        %899 = vmatpush.bf16.msra.mxu0 %v884
        %900 = vmatpush.bf16.msra.mxu0 %v883
        %901 = vmatpush.bf16.msra.mxu0 %v882
        %902 = vmatpush.bf16.msra.mxu0 %v881
        %903 = vmatpush.bf16.msra.mxu0 %v880
        %904 = vmatmul.bf16.gmra.mxu0 %v843
        %v905 = vpop.f32.mrf.mxu0
        %v906 = vadd.f32 %v846, %v905
        %v907 = vpop.f32.mrf.mxu0
        %908 = vdwg.mxu0
        %vm909 = vcmask 64512
        %910 = vst.msk [vmem:[%s609] sm:$0xff] %vm909, %v906
        %v911 = vld [vmem:[%s9] sm:$0xf]
        %v912 = vpack.c.bf16 %v906, %v906
        %v913 = vld [vmem:[%s10] sm:$0x1]
        %v915 = vperm.slane %v913, 0
        %v918 = vsel %vm909, %v912, 0
        %vm920 = vcmask 1043456
        %v922 = vsel %vm920, %v911, 0
        %924 = vmatpush.bf16.msra.mxu0 0
        %925 = vmatpush.bf16.msra.mxu0 0
        %926 = vmatpush.bf16.msra.mxu0 0
        %927 = vmatpush.bf16.msra.mxu0 0
        %928 = vmatpush.bf16.msra.mxu0 0
        %929 = vmatpush.bf16.msra.mxu0 0
        %930 = vmatpush.bf16.msra.mxu0 0
        %931 = vmatpush.bf16.msra.mxu0 %v922
        %932 = vmatmul.bf16.gmra.mxu0 %v918
        %v933 = vpop.f32.mrf.mxu0
        %v934 = vadd.f32 %v915, %v933
        %v935 = vpop.f32.mrf.mxu0
        %936 = vdwg.mxu0
        %vm937 = vcmp.gt.f32.partialorder %v934, 0.0
        %v938 = vmul.f32 %v934, 0.2
        %v939 = vsel %vm937, %v934, %v938
        %v940 = vld [vmem:[%s11] sm:$0xf]
        %v941 = vld [vmem:[%s11 + $0x4] sm:$0xf]
        %v942 = vld [vmem:[%s11 + $0x8] sm:$0xf]
        %v943 = vld [vmem:[%s11 + $0xc] sm:$0xf]
        %v944 = vld [vmem:[%s11 + $0x10] sm:$0xf]
        %v945 = vld [vmem:[%s11 + $0x14] sm:$0xf]
        %v946 = vld [vmem:[%s11 + $0x18] sm:$0xf]
        %v947 = vld [vmem:[%s11 + $0x1c] sm:$0xf]
        %v948 = vld [vmem:[%s11 + $0x20] sm:$0xf]
        %v949 = vld [vmem:[%s11 + $0x24] sm:$0xf]
        %v950 = vld [vmem:[%s11 + $0x28] sm:$0xf]
        %v951 = vld [vmem:[%s11 + $0x2c] sm:$0xf]
        %v952 = vld [vmem:[%s11 + $0x30] sm:$0xf]
        %v953 = vld [vmem:[%s11 + $0x34] sm:$0xf]
        %v954 = vld [vmem:[%s11 + $0x38] sm:$0xf]
        %v955 = vld [vmem:[%s11 + $0x3c] sm:$0xf]
        %v956 = vpack.c.bf16 %v939, %v939
        %v957 = vld [vmem:[%s12] sm:$0x1]
        %v959 = vperm.slane %v957, 0
        %v977 = vunpack.c.l.b16 %v940
        %v978 = vunpack.c.l.b16 %v941
        %v979 = vunpack.c.l.b16 %v942
        %v980 = vunpack.c.l.b16 %v943
        %v981 = vunpack.c.l.b16 %v944
        %v982 = vunpack.c.l.b16 %v945
        %v983 = vunpack.c.l.b16 %v946
        %v984 = vunpack.c.l.b16 %v947
        %v985 = vunpack.c.l.b16 %v948
        %v986 = vunpack.c.l.b16 %v949
        %v987 = vunpack.c.l.b16 %v950
        %v988 = vunpack.c.l.b16 %v951
        %v989 = vunpack.c.l.b16 %v952
        %v990 = vunpack.c.l.b16 %v953
        %v991 = vunpack.c.l.b16 %v954
        %v992 = vunpack.c.l.b16 %v955
        %v993 = vpack.c.b16 %v978, %v977
        %v994 = vpack.c.b16 %v980, %v979
        %v995 = vpack.c.b16 %v982, %v981
        %v996 = vpack.c.b16 %v984, %v983
        %v997 = vpack.c.b16 %v986, %v985
        %v998 = vpack.c.b16 %v988, %v987
        %v999 = vpack.c.b16 %v990, %v989
        %v1000 = vpack.c.b16 %v992, %v991
        %1009 = vmatpush.bf16.msra.mxu0 %v1000
        %1010 = vmatpush.bf16.msra.mxu0 %v999
        %1011 = vmatpush.bf16.msra.mxu0 %v998
        %1012 = vmatpush.bf16.msra.mxu0 %v997
        %1013 = vmatpush.bf16.msra.mxu0 %v996
        %1014 = vmatpush.bf16.msra.mxu0 %v995
        %1015 = vmatpush.bf16.msra.mxu0 %v994
        %1016 = vmatpush.bf16.msra.mxu0 %v993
        %1017 = vmatmul.bf16.gmra.mxu0 %v956
        %v1018 = vpop.f32.mrf.mxu0
        %v1019 = vadd.f32 %v959, %v1018
        %v1020 = vpop.f32.mrf.mxu0
        %1021 = vdwg.mxu0
        %vm1022 = vcmp.gt.f32.partialorder %v1019, 0.0
        %v1023 = vmul.f32 %v1019, 0.2
        %v1024 = vsel %vm1022, %v1019, %v1023
        %v1025 = vld [vmem:[#allocation4] sm:$0xf]
        %v1026 = vld [vmem:[#allocation4 + $0x4] sm:$0xf]
        %v1027 = vld [vmem:[#allocation4 + $0x8] sm:$0xf]
        %v1028 = vld [vmem:[#allocation4 + $0xc] sm:$0xf]
        %v1029 = vld [vmem:[#allocation4 + $0x10] sm:$0xf]
        %v1030 = vld [vmem:[#allocation4 + $0x14] sm:$0xf]
        %v1031 = vld [vmem:[#allocation4 + $0x18] sm:$0xf]
        %v1032 = vld [vmem:[#allocation4 + $0x1c] sm:$0xf]
        %v1033 = vld [vmem:[#allocation4 + $0x20] sm:$0xf]
        %v1034 = vld [vmem:[#allocation4 + $0x24] sm:$0xf]
        %v1035 = vld [vmem:[#allocation4 + $0x28] sm:$0xf]
        %v1036 = vld [vmem:[#allocation4 + $0x2c] sm:$0xf]
        %v1037 = vld [vmem:[#allocation4 + $0x30] sm:$0xf]
        %v1038 = vld [vmem:[#allocation4 + $0x34] sm:$0xf]
        %v1039 = vld [vmem:[#allocation4 + $0x38] sm:$0xf]
        %v1040 = vld [vmem:[#allocation4 + $0x3c] sm:$0xf]
        %v1041 = vpack.c.bf16 %v1024, %v1024
        %v1042 = vld [vmem:[%s14] sm:$0x1]
        %v1044 = vperm.slane %v1042, 0
        %v1062 = vunpack.c.l.b16 %v1025
        %v1063 = vunpack.c.l.b16 %v1026
        %v1064 = vunpack.c.l.b16 %v1027
        %v1065 = vunpack.c.l.b16 %v1028
        %v1066 = vunpack.c.l.b16 %v1029
        %v1067 = vunpack.c.l.b16 %v1030
        %v1068 = vunpack.c.l.b16 %v1031
        %v1069 = vunpack.c.l.b16 %v1032
        %v1070 = vunpack.c.l.b16 %v1033
        %v1071 = vunpack.c.l.b16 %v1034
        %v1072 = vunpack.c.l.b16 %v1035
        %v1073 = vunpack.c.l.b16 %v1036
        %v1074 = vunpack.c.l.b16 %v1037
        %v1075 = vunpack.c.l.b16 %v1038
        %v1076 = vunpack.c.l.b16 %v1039
        %v1077 = vunpack.c.l.b16 %v1040
        %v1078 = vpack.c.b16 %v1063, %v1062
        %v1079 = vpack.c.b16 %v1065, %v1064
        %v1080 = vpack.c.b16 %v1067, %v1066
        %v1081 = vpack.c.b16 %v1069, %v1068
        %v1082 = vpack.c.b16 %v1071, %v1070
        %v1083 = vpack.c.b16 %v1073, %v1072
        %v1084 = vpack.c.b16 %v1075, %v1074
        %v1085 = vpack.c.b16 %v1077, %v1076
        %1094 = vmatpush.bf16.msra.mxu0 %v1085
        %1095 = vmatpush.bf16.msra.mxu0 %v1084
        %1096 = vmatpush.bf16.msra.mxu0 %v1083
        %1097 = vmatpush.bf16.msra.mxu0 %v1082
        %1098 = vmatpush.bf16.msra.mxu0 %v1081
        %1099 = vmatpush.bf16.msra.mxu0 %v1080
        %1100 = vmatpush.bf16.msra.mxu0 %v1079
        %1101 = vmatpush.bf16.msra.mxu0 %v1078
        %1102 = vmatmul.bf16.gmra.mxu0 %v1041
        %v1103 = vpop.f32.mrf.mxu0
        %v1104 = vadd.f32 %v1044, %v1103
        %v1105 = vpop.f32.mrf.mxu0
        %1106 = vdwg.mxu0
        %vm1107 = vcmp.gt.f32.partialorder %v1104, 0.0
        %v1108 = vmul.f32 %v1104, 0.2
        %v1109 = vsel %vm1107, %v1104, %v1108
        %v1110 = vld [vmem:[%s15] sm:$0xf]
        %v1111 = vld [vmem:[%s15 + $0x4] sm:$0xf]
        %v1112 = vld [vmem:[%s15 + $0x8] sm:$0xf]
        %v1113 = vld [vmem:[%s15 + $0xc] sm:$0xf]
        %v1114 = vld [vmem:[%s15 + $0x10] sm:$0xf]
        %v1115 = vld [vmem:[%s15 + $0x14] sm:$0xf]
        %v1116 = vld [vmem:[%s15 + $0x18] sm:$0xf]
        %v1117 = vld [vmem:[%s15 + $0x1c] sm:$0xf]
        %v1118 = vld [vmem:[%s15 + $0x20] sm:$0xf]
        %v1119 = vld [vmem:[%s15 + $0x24] sm:$0xf]
        %v1120 = vld [vmem:[%s15 + $0x28] sm:$0xf]
        %v1121 = vld [vmem:[%s15 + $0x2c] sm:$0xf]
        %v1122 = vld [vmem:[%s15 + $0x30] sm:$0xf]
        %v1123 = vld [vmem:[%s15 + $0x34] sm:$0xf]
        %v1124 = vld [vmem:[%s15 + $0x38] sm:$0xf]
        %v1125 = vld [vmem:[%s15 + $0x3c] sm:$0xf]
        %v1126 = vpack.c.bf16 %v1109, %v1109
        %v1127 = vld [vmem:[%s16] sm:$0x1]
        %v1129 = vperm.slane %v1127, 0
        %v1147 = vunpack.c.l.b16 %v1110
        %v1148 = vunpack.c.l.b16 %v1111
        %v1149 = vunpack.c.l.b16 %v1112
        %v1150 = vunpack.c.l.b16 %v1113
        %v1151 = vunpack.c.l.b16 %v1114
        %v1152 = vunpack.c.l.b16 %v1115
        %v1153 = vunpack.c.l.b16 %v1116
        %v1154 = vunpack.c.l.b16 %v1117
        %v1155 = vunpack.c.l.b16 %v1118
        %v1156 = vunpack.c.l.b16 %v1119
        %v1157 = vunpack.c.l.b16 %v1120
        %v1158 = vunpack.c.l.b16 %v1121
        %v1159 = vunpack.c.l.b16 %v1122
        %v1160 = vunpack.c.l.b16 %v1123
        %v1161 = vunpack.c.l.b16 %v1124
        %v1162 = vunpack.c.l.b16 %v1125
        %v1163 = vpack.c.b16 %v1148, %v1147
        %v1164 = vpack.c.b16 %v1150, %v1149
        %v1165 = vpack.c.b16 %v1152, %v1151
        %v1166 = vpack.c.b16 %v1154, %v1153
        %v1167 = vpack.c.b16 %v1156, %v1155
        %v1168 = vpack.c.b16 %v1158, %v1157
        %v1169 = vpack.c.b16 %v1160, %v1159
        %v1170 = vpack.c.b16 %v1162, %v1161
        %1179 = vmatpush.bf16.msra.mxu0 %v1170
        %1180 = vmatpush.bf16.msra.mxu0 %v1169
        %1181 = vmatpush.bf16.msra.mxu0 %v1168
        %1182 = vmatpush.bf16.msra.mxu0 %v1167
        %1183 = vmatpush.bf16.msra.mxu0 %v1166
        %1184 = vmatpush.bf16.msra.mxu0 %v1165
        %1185 = vmatpush.bf16.msra.mxu0 %v1164
        %1186 = vmatpush.bf16.msra.mxu0 %v1163
        %1187 = vmatmul.bf16.gmra.mxu0 %v1126
        %v1188 = vpop.f32.mrf.mxu0
        %v1189 = vadd.f32 %v1129, %v1188
        %v1190 = vpop.f32.mrf.mxu0
        %1191 = vdwg.mxu0
        %1193 = vrot.lane.b32.xlu0 %v1189, 124
        %v1194 = vpop.permute.xlu0 %1193
        %1196 = vrot.lane.b32.xlu0 %v1189, 120
        %v1197 = vpop.permute.xlu0 %1196
        %1199 = vrot.lane.b32.xlu0 %v1189, 116
        %v1200 = vpop.permute.xlu0 %1199
        %1202 = vrot.lane.b32.xlu0 %v1189, 112
        %v1203 = vpop.permute.xlu0 %1202
        %1205 = vrot.lane.b32.xlu0 %v1189, 108
        %v1206 = vpop.permute.xlu0 %1205
        %1208 = vrot.lane.b32.xlu0 %v1189, 104
        %v1209 = vpop.permute.xlu0 %1208
        %1211 = vrot.lane.b32.xlu0 %v1189, 100
        %v1212 = vpop.permute.xlu0 %1211
        %v1214 = vrot.slane %v1197, 4
        %vm1215 = vcmask 1047556
        %v1216 = vsel %vm1215, %v1214, %v1189
        %v1217 = vrot.slane %v1189, 4
        %v1218 = vsel %vm1215, %v1197, %v1217
        %v1220 = vunpack.c.l.s4 1983009808
        %v1221 = vunpack.c.0.s8 %v1220
        %v1222 = vperm.slane %v1216, %v1221
        %v1224 = vunpack.c.l.s4 1983009808
        %v1225 = vunpack.c.0.s8 %v1224
        %v1226 = vperm.slane %v1218, %v1225
        %v1227 = vrot.slane %v1200, 4
        %v1228 = vsel %vm1215, %v1227, %v1194
        %v1229 = vrot.slane %v1194, 4
        %v1230 = vsel %vm1215, %v1200, %v1229
        %v1232 = vunpack.c.l.s4 1983009808
        %v1233 = vunpack.c.0.s8 %v1232
        %v1234 = vperm.slane %v1228, %v1233
        %v1236 = vunpack.c.l.s4 1983009808
        %v1237 = vunpack.c.0.s8 %v1236
        %v1238 = vperm.slane %v1230, %v1237
        %v1239 = vrot.slane %v1209, 4
        %v1240 = vsel %vm1215, %v1239, %v1203
        %v1241 = vrot.slane %v1203, 4
        %v1242 = vsel %vm1215, %v1209, %v1241
        %v1244 = vunpack.c.l.s4 1983009808
        %v1245 = vunpack.c.0.s8 %v1244
        %v1246 = vperm.slane %v1240, %v1245
        %v1248 = vunpack.c.l.s4 1983009808
        %v1249 = vunpack.c.0.s8 %v1248
        %v1250 = vperm.slane %v1242, %v1249
        %v1251 = vrot.slane %v1212, 4
        %v1252 = vsel %vm1215, %v1251, %v1206
        %v1253 = vrot.slane %v1206, 4
        %v1254 = vsel %vm1215, %v1212, %v1253
        %v1256 = vunpack.c.l.s4 1983009808
        %v1257 = vunpack.c.0.s8 %v1256
        %v1258 = vperm.slane %v1252, %v1257
        %v1260 = vunpack.c.l.s4 1983009808
        %v1261 = vunpack.c.0.s8 %v1260
        %v1262 = vperm.slane %v1254, %v1261
        %v1263 = vrot.slane %v1234, 4
        %v1264 = vsel %vm1215, %v1263, %v1222
        %v1265 = vrot.slane %v1222, 4
        %v1266 = vsel %vm1215, %v1234, %v1265
        %v1268 = vunpack.c.l.s4 1934713408
        %v1269 = vunpack.c.0.s8 %v1268
        %v1270 = vperm.slane %v1264, %v1269
        %v1272 = vunpack.c.l.s4 1934713408
        %v1273 = vunpack.c.0.s8 %v1272
        %v1274 = vperm.slane %v1266, %v1273
        %v1275 = vrot.slane %v1238, 4
        %v1276 = vsel %vm1215, %v1275, %v1226
        %v1277 = vrot.slane %v1226, 4
        %v1278 = vsel %vm1215, %v1238, %v1277
        %v1280 = vunpack.c.l.s4 1934713408
        %v1281 = vunpack.c.0.s8 %v1280
        %v1282 = vperm.slane %v1276, %v1281
        %v1284 = vunpack.c.l.s4 1934713408
        %v1285 = vunpack.c.0.s8 %v1284
        %v1286 = vperm.slane %v1278, %v1285
        %v1287 = vrot.slane %v1258, 4
        %v1288 = vsel %vm1215, %v1287, %v1246
        %v1289 = vrot.slane %v1246, 4
        %v1290 = vsel %vm1215, %v1258, %v1289
        %v1292 = vunpack.c.l.s4 1934713408
        %v1293 = vunpack.c.0.s8 %v1292
        %v1294 = vperm.slane %v1288, %v1293
        %v1296 = vunpack.c.l.s4 1934713408
        %v1297 = vunpack.c.0.s8 %v1296
        %v1298 = vperm.slane %v1290, %v1297
        %v1299 = vrot.slane %v1262, 4
        %v1300 = vsel %vm1215, %v1299, %v1250
        %v1301 = vrot.slane %v1250, 4
        %v1302 = vsel %vm1215, %v1262, %v1301
        %v1304 = vunpack.c.l.s4 1934713408
        %v1305 = vunpack.c.0.s8 %v1304
        %v1306 = vperm.slane %v1300, %v1305
        %v1308 = vunpack.c.l.s4 1934713408
        %v1309 = vunpack.c.0.s8 %v1308
        %v1310 = vperm.slane %v1302, %v1309
        %v1311 = vrot.slane %v1294, 4
        %v1312 = vsel %vm1215, %v1311, %v1270
        %v1313 = vrot.slane %v1270, 4
        %v1314 = vsel %vm1215, %v1294, %v1313
        %v1315 = vrot.slane %v1298, 4
        %v1316 = vsel %vm1215, %v1315, %v1274
        %v1317 = vrot.slane %v1274, 4
        %v1318 = vsel %vm1215, %v1298, %v1317
        %v1319 = vrot.slane %v1306, 4
        %v1320 = vsel %vm1215, %v1319, %v1282
        %v1321 = vrot.slane %v1282, 4
        %v1322 = vsel %vm1215, %v1306, %v1321
        %v1323 = vrot.slane %v1310, 4
        %v1324 = vsel %vm1215, %v1323, %v1286
        %v1325 = vrot.slane %v1286, 4
        %v1326 = vsel %vm1215, %v1310, %v1325
        %vm1327 = vcmask 31744
        %v1328 = vsel %vm1327, %v1312, -inf
        %1329 = vmax.xlane.f32.xlu0 %v1328
        %v1330 = vpop.xlane.xlu0 %1329
        %v1331 = vsel %vm1327, %v1314, -inf
        %1332 = vmax.xlane.f32.xlu0 %v1331
        %v1333 = vpop.xlane.xlu0 %1332
        %v1334 = vsel %vm1327, %v1316, -inf
        %1335 = vmax.xlane.f32.xlu0 %v1334
        %v1336 = vpop.xlane.xlu0 %1335
        %v1337 = vsel %vm1327, %v1318, -inf
        %1338 = vmax.xlane.f32.xlu0 %v1337
        %v1339 = vpop.xlane.xlu0 %1338
        %v1340 = vsel %vm1327, %v1320, -inf
        %1341 = vmax.xlane.f32.xlu0 %v1340
        %v1342 = vpop.xlane.xlu0 %1341
        %v1343 = vsel %vm1327, %v1322, -inf
        %1344 = vmax.xlane.f32.xlu0 %v1343
        %v1345 = vpop.xlane.xlu0 %1344
        %v1346 = vsel %vm1327, %v1324, -inf
        %1347 = vmax.xlane.f32.xlu0 %v1346
        %v1348 = vpop.xlane.xlu0 %1347
        %v1349 = vsel %vm1327, %v1326, -inf
        %1350 = vmax.xlane.f32.xlu0 %v1349
        %v1351 = vpop.xlane.xlu0 %1350
        %v1352 = vsub.f32 %v1312, %v1330
        %v1353 = vsub.f32 %v1314, %v1333
        %v1354 = vsub.f32 %v1316, %v1336
        %v1355 = vsub.f32 %v1318, %v1339
        %v1356 = vsub.f32 %v1320, %v1342
        %v1357 = vsub.f32 %v1322, %v1345
        %v1358 = vsub.f32 %v1324, %v1348
        %v1359 = vsub.f32 %v1326, %v1351
        %v1360 = vmul.f32 %v1352, 1.442695
        %v1361 = vpow.pop %v1360
        %v1362 = vmul.f32 %v1353, 1.442695
        %v1363 = vpow.pop %v1362
        %v1364 = vmul.f32 %v1354, 1.442695
        %v1365 = vpow.pop %v1364
        %v1366 = vmul.f32 %v1355, 1.442695
        %v1367 = vpow.pop %v1366
        %v1368 = vmul.f32 %v1356, 1.442695
        %v1369 = vpow.pop %v1368
        %v1370 = vmul.f32 %v1357, 1.442695
        %v1371 = vpow.pop %v1370
        %v1372 = vmul.f32 %v1358, 1.442695
        %v1373 = vpow.pop %v1372
        %v1374 = vmul.f32 %v1359, 1.442695
        %v1375 = vpow.pop %v1374
        %v1376 = vsel %vm1327, %v1361, 0.0
        %1377 = vadd.xlane.f32.xlu0 %v1376
        %v1378 = vpop.xlane.xlu0 %1377
        %v1379 = vsel %vm1327, %v1363, 0.0
        %1380 = vadd.xlane.f32.xlu0 %v1379
        %v1381 = vpop.xlane.xlu0 %1380
        %v1382 = vsel %vm1327, %v1365, 0.0
        %1383 = vadd.xlane.f32.xlu0 %v1382
        %v1384 = vpop.xlane.xlu0 %1383
        %v1385 = vsel %vm1327, %v1367, 0.0
        %1386 = vadd.xlane.f32.xlu0 %v1385
        %v1387 = vpop.xlane.xlu0 %1386
        %v1388 = vsel %vm1327, %v1369, 0.0
        %1389 = vadd.xlane.f32.xlu0 %v1388
        %v1390 = vpop.xlane.xlu0 %1389
        %v1391 = vsel %vm1327, %v1371, 0.0
        %1392 = vadd.xlane.f32.xlu0 %v1391
        %v1393 = vpop.xlane.xlu0 %1392
        %v1394 = vsel %vm1327, %v1373, 0.0
        %1395 = vadd.xlane.f32.xlu0 %v1394
        %v1396 = vpop.xlane.xlu0 %1395
        %v1397 = vsel %vm1327, %v1375, 0.0
        %1398 = vadd.xlane.f32.xlu0 %v1397
        %v1399 = vpop.xlane.xlu0 %1398
        %v1400 = vrcp.pop %v1378
        %v1401 = vrcp.pop %v1381
        %v1402 = vrcp.pop %v1384
        %v1403 = vrcp.pop %v1387
        %v1404 = vrcp.pop %v1390
        %v1405 = vrcp.pop %v1393
        %v1406 = vrcp.pop %v1396
        %v1407 = vrcp.pop %v1399
        %v1408 = vmul.f32 %v1361, %v1400
        %v1409 = vmul.f32 %v1363, %v1401
        %v1410 = vmul.f32 %v1365, %v1402
        %v1411 = vmul.f32 %v1367, %v1403
        %v1412 = vmul.f32 %v1369, %v1404
        %v1413 = vmul.f32 %v1371, %v1405
        %v1414 = vmul.f32 %v1373, %v1406
        %v1415 = vmul.f32 %v1375, %v1407
        %v1416 = vrot.slane %v1410, 4
        %v1417 = vsel %vm1215, %v1416, %v1408
        %v1418 = vrot.slane %v1408, 4
        %v1419 = vsel %vm1215, %v1410, %v1418
        %v1421 = vunpack.c.l.s4 1983009808
        %v1422 = vunpack.c.0.s8 %v1421
        %v1423 = vperm.slane %v1417, %v1422
        %v1425 = vunpack.c.l.s4 1983009808
        %v1426 = vunpack.c.0.s8 %v1425
        %v1427 = vperm.slane %v1419, %v1426
        %v1428 = vrot.slane %v1411, 4
        %v1429 = vsel %vm1215, %v1428, %v1409
        %v1430 = vrot.slane %v1409, 4
        %v1431 = vsel %vm1215, %v1411, %v1430
        %v1433 = vunpack.c.l.s4 1983009808
        %v1434 = vunpack.c.0.s8 %v1433
        %v1435 = vperm.slane %v1429, %v1434
        %v1437 = vunpack.c.l.s4 1983009808
        %v1438 = vunpack.c.0.s8 %v1437
        %v1439 = vperm.slane %v1431, %v1438
        %v1440 = vrot.slane %v1414, 4
        %v1441 = vsel %vm1215, %v1440, %v1412
        %v1442 = vrot.slane %v1412, 4
        %v1443 = vsel %vm1215, %v1414, %v1442
        %v1445 = vunpack.c.l.s4 1983009808
        %v1446 = vunpack.c.0.s8 %v1445
        %v1447 = vperm.slane %v1441, %v1446
        %v1449 = vunpack.c.l.s4 1983009808
        %v1450 = vunpack.c.0.s8 %v1449
        %v1451 = vperm.slane %v1443, %v1450
        %v1452 = vrot.slane %v1415, 4
        %v1453 = vsel %vm1215, %v1452, %v1413
        %v1454 = vrot.slane %v1413, 4
        %v1455 = vsel %vm1215, %v1415, %v1454
        %v1457 = vunpack.c.l.s4 1983009808
        %v1458 = vunpack.c.0.s8 %v1457
        %v1459 = vperm.slane %v1453, %v1458
        %v1461 = vunpack.c.l.s4 1983009808
        %v1462 = vunpack.c.0.s8 %v1461
        %v1463 = vperm.slane %v1455, %v1462
        %v1464 = vrot.slane %v1435, 4
        %v1465 = vsel %vm1215, %v1464, %v1423
        %v1466 = vrot.slane %v1423, 4
        %v1467 = vsel %vm1215, %v1435, %v1466
        %v1469 = vunpack.c.l.s4 1934713408
        %v1470 = vunpack.c.0.s8 %v1469
        %v1471 = vperm.slane %v1465, %v1470
        %v1473 = vunpack.c.l.s4 1934713408
        %v1474 = vunpack.c.0.s8 %v1473
        %v1475 = vperm.slane %v1467, %v1474
        %v1476 = vrot.slane %v1439, 4
        %v1477 = vsel %vm1215, %v1476, %v1427
        %v1478 = vrot.slane %v1427, 4
        %v1479 = vsel %vm1215, %v1439, %v1478
        %v1481 = vunpack.c.l.s4 1934713408
        %v1482 = vunpack.c.0.s8 %v1481
        %v1483 = vperm.slane %v1477, %v1482
        %v1485 = vunpack.c.l.s4 1934713408
        %v1486 = vunpack.c.0.s8 %v1485
        %v1487 = vperm.slane %v1479, %v1486
        %v1488 = vrot.slane %v1459, 4
        %v1489 = vsel %vm1215, %v1488, %v1447
        %v1490 = vrot.slane %v1447, 4
        %v1491 = vsel %vm1215, %v1459, %v1490
        %v1493 = vunpack.c.l.s4 1934713408
        %v1494 = vunpack.c.0.s8 %v1493
        %v1495 = vperm.slane %v1489, %v1494
        %v1497 = vunpack.c.l.s4 1934713408
        %v1498 = vunpack.c.0.s8 %v1497
        %v1499 = vperm.slane %v1491, %v1498
        %v1500 = vrot.slane %v1463, 4
        %v1501 = vsel %vm1215, %v1500, %v1451
        %v1502 = vrot.slane %v1451, 4
        %v1503 = vsel %vm1215, %v1463, %v1502
        %v1505 = vunpack.c.l.s4 1934713408
        %v1506 = vunpack.c.0.s8 %v1505
        %v1507 = vperm.slane %v1501, %v1506
        %v1509 = vunpack.c.l.s4 1934713408
        %v1510 = vunpack.c.0.s8 %v1509
        %v1511 = vperm.slane %v1503, %v1510
        %v1512 = vrot.slane %v1495, 4
        %v1513 = vsel %vm1215, %v1512, %v1471
        %v1514 = vrot.slane %v1471, 4
        %v1515 = vsel %vm1215, %v1495, %v1514
        %v1516 = vrot.slane %v1499, 4
        %v1517 = vsel %vm1215, %v1516, %v1475
        %v1518 = vrot.slane %v1475, 4
        %v1519 = vsel %vm1215, %v1499, %v1518
        %v1520 = vrot.slane %v1507, 4
        %v1521 = vsel %vm1215, %v1520, %v1483
        %v1522 = vrot.slane %v1483, 4
        %v1523 = vsel %vm1215, %v1507, %v1522
        %v1524 = vrot.slane %v1511, 4
        %v1525 = vsel %vm1215, %v1524, %v1487
        %v1526 = vrot.slane %v1487, 4
        %v1527 = vsel %vm1215, %v1511, %v1526
        %1529 = vrot.lane.b32.xlu0 %v1515, 4
        %v1530 = vpop.permute.xlu0 %1529
        %1533 = vrot.lane.b32.xlu0 %v1517, 8
        %v1534 = vpop.permute.xlu0 %1533
        %1537 = vrot.lane.b32.xlu0 %v1519, 12
        %v1538 = vpop.permute.xlu0 %1537
        %1541 = vrot.lane.b32.xlu0 %v1521, 16
        %v1542 = vpop.permute.xlu0 %1541
        %1545 = vrot.lane.b32.xlu0 %v1523, 20
        %v1546 = vpop.permute.xlu0 %1545
        %1549 = vrot.lane.b32.xlu0 %v1525, 24
        %v1550 = vpop.permute.xlu0 %1549
        %1553 = vrot.lane.b32.xlu0 %v1527, 28
        %v1554 = vpop.permute.xlu0 %1553
        %v1556 = vsel %vm1327, %v1513, %v1530
        %v1557 = vsel %vm909, %v1556, %v1534
        %vm1558 = vcmask 97280
        %v1559 = vsel %vm1558, %v1557, %v1538
        %vm1560 = vcmask 130048
        %v1561 = vsel %vm1560, %v1559, %v1542
        %vm1562 = vcmask 162816
        %v1563 = vsel %vm1562, %v1561, %v1546
        %vm1564 = vcmask 195584
        %v1565 = vsel %vm1564, %v1563, %v1550
        %vm1566 = vcmask 228352
        %v1567 = vsel %vm1566, %v1565, %v1554
        %1568 = vst.msk [vmem:[%s613] sm:$0xff] %vm637, %v1567
        %p1569 = scmp.lt.s32.totalorder %s32, 1
        %s1570 = scalar_select %p1569, %s32, 1
        %s1571 = smul.addr %s1570, 8
        %s1572 = scalar_lea.vmem %s17, %s1571
        %p1573 = scmp.lt.s32.totalorder %s32, 1
        %s1574 = scalar_select %p1573, %s32, 1
        %s1575 = smul.addr %s1574, 8
        %s1576 = scalar_lea.vmem %s18, %s1575
        // Predicated region
        $region97: #{mmd_vae_forward.1} parent=87 // pred_check
          %p1577 = pneg %p412
        $region98: #{mmd_vae_forward.1} parent=87 // pred_check_branch
          %1579 = sbr.rel (%p1577) target = $region100
        $region99: #{mmd_vae_forward.1} parent=87 // pred_region
          _
        $region100: #{mmd_vae_forward.1} parent=87 // pred_fallthru
          _
        // Predicated region
        $region101: #{mmd_vae_forward.1} parent=87 // pred_check
          %p1580 = pneg %p438
        $region102: #{mmd_vae_forward.1} parent=87 // pred_check_branch
          %1582 = sbr.rel (%p1580) target = $region104
        $region103: #{mmd_vae_forward.1} parent=87 // pred_region
          _
        $region104: #{mmd_vae_forward.1} parent=87 // pred_fallthru
          _
      $region88: #{mmd_vae_forward.1} parent=5 // pred_fallthru
        _
      %p1583 = scmp.le.s32.totalorder 2, %s27
      // Predicated region
      $region105: #{mmd_vae_forward.1} parent=5 // pred_check
        %p1584 = pneg %p1583
      $region106: #{mmd_vae_forward.1} parent=5 // pred_check_branch
        %1586 = sbr.rel (%p1584) target = $region108
      $region107: #{mmd_vae_forward.1} parent=5 // pred_region
        %s1587 = ssub.s32 %s27, 2
        // Predicated region
        $region109: #{mmd_vae_forward.1} parent=107 // pred_check
          %p1588 = pneg %p418
        $region110: #{mmd_vae_forward.1} parent=107 // pred_check_branch
          %1590 = sbr.rel (%p1588) target = $region112
        $region111: #{mmd_vae_forward.1} parent=107 // pred_region
          %p1591 = scmp.lt.s32.totalorder %s33, 1
          %s1592 = scalar_select %p1591, %s33, 1
          %s1593 = smul.addr %s1592, 8
          %s1594 = scalar_lea.vmem %s17, %s1593
        $region112: #{mmd_vae_forward.1} parent=107 // pred_fallthru
          _
        // Predicated region
        $region113: #{mmd_vae_forward.1} parent=107 // pred_check
          %p1595 = pneg %p444
        $region114: #{mmd_vae_forward.1} parent=107 // pred_check_branch
          %1597 = sbr.rel (%p1595) target = $region116
        $region115: #{mmd_vae_forward.1} parent=107 // pred_region
          %p1598 = scmp.lt.s32.totalorder %s33, 1
          %s1599 = scalar_select %p1598, %s33, 1
          %s1600 = smul.addr %s1599, 8
          %s1601 = scalar_lea.vmem %s18, %s1600
        $region116: #{mmd_vae_forward.1} parent=107 // pred_fallthru
          _
      $region108: #{mmd_vae_forward.1} parent=5 // pred_fallthru
        _
    $region6: #{mmd_vae_forward.1} parent=1 // loop_footer
      %s31 = sadd.s32 1, %s27
    $region7: #{mmd_vae_forward.1} parent=1 // loop_footer_branch
      %26 = sbr.rel target = $region3
    $region8: #{mmd_vae_forward.1} parent=1 // loop_exit
      _
    %1602 = vsyncpa [#allocation3], 1
    %s1603 = scalar_lea.sflag [#allocation3], 1
    %1604 = vsyncpa %s1603, 1
    %1605 = vsyncpa [#allocation5], 1

</llo_original>
